<compile_context>
chip_gen: v7x
topology: tpu7x:2x2x1
jax: 0.10.0
libtpu: 0.0.40
codegen_flags: <defaults>
</compile_context>

<pallas_src>
import functools

import jax
import jax.numpy as jnp
from jax.experimental import pallas as pl
from jax.experimental.pallas import tpu as pltpu


def _nb1d_kernel(x_ref,
                 w1_ref, b1_ref, w2_ref, b2_ref,
                 w3_ref, b3_ref, w4_ref, b4_ref,
                 o_ref, *, dilated, H, W):
    C = x_ref.shape[0]
    L = x_ref.shape[1]                      # lanes in this block (= nb * H * W)
    HW = H * W
    d = dilated

    # Boundary masks from a single (1, L) iota row; broadcast against (C, L).
    lane = jax.lax.broadcasted_iota(jnp.int32, (1, L), 1)
    pos = lane % HW                         # flattened position within its image
    col = lane % W                          # column within its image
    m_h1 = (pos >= W,     pos < HW - W)     # conv3x1_1 taps
    m_w1 = (col >= 1,     col < W - 1)      # conv1x3_1 taps
    m_hd = (pos >= d * W, pos < HW - d * W) # conv3x1_2 taps (dilated)
    m_wd = (col >= d,     col < W - d)      # conv1x3_2 taps (dilated)

    def conv1d3(z, w_ref, b_ref, step, mm, mp):
        """Fused 3-tap 1-D conv with full channel mixing + bias.

        w_ref: (C, 3C) bf16 fused weight [tap0 | tap1 | tap2];
        b_ref: (C, 1) f32 bias (BN already folded for conv2/conv4).
        Shifted taps via XLU rolls; out-of-image reads masked to zero (implicit
        zero padding; also blocks cross-image leakage with the folded batch).
        """
        zm = jnp.where(mm, pltpu.roll(z, step, 1), 0.0)       # z[p - step]
        zp = jnp.where(mp, pltpu.roll(z, L - step, 1), 0.0)   # z[p + step]
        z3 = jnp.concatenate([zm, z, zp], axis=0).astype(jnp.bfloat16)
        y = jnp.dot(w_ref[...], z3, preferred_element_type=jnp.float32)
        return y + b_ref[...]

    y = conv1d3(x_ref[...], w1_ref, b1_ref, W, *m_h1)         # conv3x1_1
    y = jnp.maximum(y, 0.0)                                   # relu
    y = conv1d3(y, w2_ref, b2_ref, 1, *m_w1)                  # conv1x3_1 + bn1
    y = jnp.maximum(y, 0.0)                                   # relu
    y = conv1d3(y, w3_ref, b3_ref, d * W, *m_hd)              # conv3x1_2
    y = jnp.maximum(y, 0.0)                                   # relu
    y = conv1d3(y, w4_ref, b4_ref, d, *m_wd)                  # conv1x3_2 + bn2
    # TODO(synk): Dropout2d supported only as the dropprob == 0 no-op;
    # training-mode dropout / BatchNorm batch statistics are not implemented.
    o_ref[...] = jnp.maximum(y + x_ref[...], 0.0).astype(o_ref.dtype)


def non_bottleneck_1d_forward(x, params, dilated):
    """x: (N, C, H, W) f32; params: conv weights/biases + folded BN params."""
    N, C, H, W = x.shape
    HW = H * W
    # Fold batch into the lane axis (layout plumbing only): (N,C,H,W)->(C,N*HW).
    x2 = jnp.transpose(x, (1, 0, 2, 3)).reshape(C, N * HW)

    def fuse_w(w, scale=None):
        # (C_out, C_in, 3) -> (C_out, 3*C_in) ordered [tap0 | tap1 | tap2];
        # optionally fold the eval-mode BN scale into the output rows.
        wf = jnp.transpose(w, (0, 2, 1)).reshape(C, 3 * C).astype(jnp.float32)
        if scale is not None:
            wf = scale[:, None] * wf
        return wf.astype(jnp.bfloat16)          # bf16 MXU operand (f32 accumulate)

    def fuse_b(b, scale=None, shift=None):
        bb = b.astype(jnp.float32)
        if scale is not None:
            bb = scale * bb + shift              # merge bias into BN shift
        return bb.reshape(C, 1).astype(jnp.float32)

    s1, t1 = params["scale1"], params["shift1"]
    s2, t2 = params["scale2"], params["shift2"]

    # One grid step over the whole folded batch (test regime). Weights/biases
    # have constant index_maps so they are not re-DMA'd per step.
    L = N * HW
    kern = functools.partial(_nb1d_kernel, dilated=dilated, H=H, W=W)
    xspec = pl.BlockSpec((C, L), lambda i: (0, i))
    wspec = pl.BlockSpec((C, 3 * C), lambda i: (0, 0))
    bspec = pl.BlockSpec((C, 1), lambda i: (0, 0))

    out = pl.pallas_call(
        kern,
        out_shape=jax.ShapeDtypeStruct((C, N * HW), x.dtype),
        grid=(N * HW // L,),
        in_specs=[xspec,
                  wspec, bspec, wspec, bspec,
                  wspec, bspec, wspec, bspec],
        out_specs=xspec,
        compiler_params=pltpu.CompilerParams(dimension_semantics=("parallel",)),
    )(x2,
      fuse_w(params["w1"]), fuse_b(params["b1"]),
      fuse_w(params["w2"], s1), fuse_b(params["b2"], s1, t1),
      fuse_w(params["w3"]), fuse_b(params["b3"]),
      fuse_w(params["w4"], s2), fuse_b(params["b4"], s2, t2))
    return jnp.transpose(out.reshape(C, N, H, W), (1, 0, 2, 3))


def _reference_forward(x, p, dilated):
    """Pure-JAX (XLA conv, f32) reference, identical math to the PyTorch module."""
    def conv(z, w4d, b, pad, dil):
        y = jax.lax.conv_general_dilated(
            z, w4d, window_strides=(1, 1), padding=pad, rhs_dilation=dil,
            dimension_numbers=("NCHW", "OIHW", "NCHW"))
        return y + b[None, :, None, None]

    d = dilated
    y = conv(x, p["w1"][:, :, :, None], p["b1"], ((1, 1), (0, 0)), (1, 1))
    y = jnp.maximum(y, 0.0)
    y = conv(y, p["w2"][:, :, None, :], p["b2"], ((0, 0), (1, 1)), (1, 1))
    y = y * p["scale1"][None, :, None, None] + p["shift1"][None, :, None, None]
    y = jnp.maximum(y, 0.0)
    y = conv(y, p["w3"][:, :, :, None], p["b3"], ((d, d), (0, 0)), (d, 1))
    y = jnp.maximum(y, 0.0)
    y = conv(y, p["w4"][:, :, None, :], p["b4"], ((0, 0), (d, d)), (1, d))
    y = y * p["scale2"][None, :, None, None] + p["shift2"][None, :, None, None]
    return jnp.maximum(y + x, 0.0)


def make_params(key, chann, eps=1e-3):
    ks = jax.random.split(key, 16)
    w = lambda k: 0.2 * jax.random.normal(k, (chann, chann, 3), jnp.float32)
    v = lambda k: 0.1 * jax.random.normal(k, (chann,), jnp.float32)
    p = {
        "w1": w(ks[0]), "b1": v(ks[1]),
        "w2": w(ks[2]), "b2": v(ks[3]),
        "w3": w(ks[4]), "b3": v(ks[5]),
        "w4": w(ks[6]), "b4": v(ks[7]),
    }
    for i, name in enumerate(("1", "2")):
        gamma = 1.0 + 0.1 * jax.random.normal(ks[8 + 4 * i], (chann,), jnp.float32)
        beta = 0.1 * jax.random.normal(ks[9 + 4 * i], (chann,), jnp.float32)
        mean = 0.1 * jax.random.normal(ks[10 + 4 * i], (chann,), jnp.float32)
        var = jax.random.uniform(ks[11 + 4 * i], (chann,), jnp.float32, 0.5, 1.5)
        scale = gamma / jnp.sqrt(var + eps)
        p["scale" + name] = scale
        p["shift" + name] = beta - mean * scale
    return p


if __name__ == "__main__":
    key = jax.random.PRNGKey(0)
    kx, kp = jax.random.split(key)
    N, C, H, W = 2, 8, 16, 32     # batch=2, chann=8, spatial=16x32 (folded lanes=1024)
    dilated = 2                   # dropprob = 0.0 (dropout branch is skipped)
    x = jax.random.normal(kx, (N, C, H, W), jnp.float32)
    params = make_params(kp, C)

    out = non_bottleneck_1d_forward(x, params, dilated)
    out = jax.block_until_ready(out)

    ref = _reference_forward(x, params, dilated)
    if out.shape != ref.shape:
        raise AssertionError(f"shape mismatch: {out.shape} vs {ref.shape}")
    # Error bound: bf16 MXU inputs (eps ~ 2^-8) on both weights and activations,
    # chained through 4 unit-gain convs -> RMS rel. error ~ 4*2*2.3e-3 ~ 2e-2
    # worst-case over the tile; 5e-2 atol/rtol leaves ~2x margin vs f32 reference.
    if not bool(jnp.allclose(out, ref, atol=5e-2, rtol=5e-2)):
        err = float(jnp.max(jnp.abs(out - ref)))
        raise AssertionError(f"numerical mismatch, max abs err = {err}")
    print("KERNEL_OK")
</pallas_src>

<mosaic_0001>
module attributes {stable_mosaic.version = 11 : i64} {
  func.func @_nb1d_kernel(%arg0: i32, %arg1: memref<8x1024xf32, #tpu.memory_space<vmem>>, %arg2: memref<8x24xbf16, #tpu.memory_space<vmem>>, %arg3: memref<8x1xf32, #tpu.memory_space<vmem>>, %arg4: memref<8x24xbf16, #tpu.memory_space<vmem>>, %arg5: memref<8x1xf32, #tpu.memory_space<vmem>>, %arg6: memref<8x24xbf16, #tpu.memory_space<vmem>>, %arg7: memref<8x1xf32, #tpu.memory_space<vmem>>, %arg8: memref<8x24xbf16, #tpu.memory_space<vmem>>, %arg9: memref<8x1xf32, #tpu.memory_space<vmem>>, %arg10: memref<8x1024xf32, #tpu.memory_space<vmem>>) attributes {dimension_semantics = [#tpu.dimension_semantics<parallel>], iteration_bounds = array<i64: 1>, scalar_prefetch = 0 : i64, scratch_operands = 0 : i64, tpu.core_type = #tpu.core_type<tc>, window_params = [{transform_indices = @transform_0, window_bounds = array<i64: 8, 1024>}, {pipeline_mode = #tpu.pipeline_mode<synchronous>, transform_indices = @transform_1, window_bounds = array<i64: 8, 24>}, {pipeline_mode = #tpu.pipeline_mode<synchronous>, transform_indices = @transform_2, window_bounds = array<i64: 8, 1>}, {pipeline_mode = #tpu.pipeline_mode<synchronous>, transform_indices = @transform_3, window_bounds = array<i64: 8, 24>}, {pipeline_mode = #tpu.pipeline_mode<synchronous>, transform_indices = @transform_4, window_bounds = array<i64: 8, 1>}, {pipeline_mode = #tpu.pipeline_mode<synchronous>, transform_indices = @transform_5, window_bounds = array<i64: 8, 24>}, {pipeline_mode = #tpu.pipeline_mode<synchronous>, transform_indices = @transform_6, window_bounds = array<i64: 8, 1>}, {pipeline_mode = #tpu.pipeline_mode<synchronous>, transform_indices = @transform_7, window_bounds = array<i64: 8, 24>}, {pipeline_mode = #tpu.pipeline_mode<synchronous>, transform_indices = @transform_8, window_bounds = array<i64: 8, 1>}, {transform_indices = @transform_9, window_bounds = array<i64: 8, 1024>}]} {
    %0 = tpu.iota {dimensions = array<i32: 1>} : vector<1x1024xi32>
    %c512_i32 = arith.constant 512 : i32
    %c0_i32 = arith.constant 0 : i32
    %1 = arith.cmpi eq, %c512_i32, %c0_i32 : i32
    %c1_i32 = arith.constant 1 : i32
    %2 = arith.select %1, %c1_i32, %c512_i32 : i32
    %3 = vector.broadcast %2 : i32 to vector<1x1024xi32>
    %4 = arith.remsi %0, %3 : vector<1x1024xi32>
    %c0_i32_0 = arith.constant 0 : i32
    %5 = vector.broadcast %c0_i32_0 : i32 to vector<1x1024xi32>
    %6 = arith.cmpi ne, %4, %5 : vector<1x1024xi32>
    %c0_i32_1 = arith.constant 0 : i32
    %7 = vector.broadcast %c0_i32_1 : i32 to vector<1x1024xi32>
    %8 = arith.cmpi slt, %4, %7 : vector<1x1024xi32>
    %c0_i32_2 = arith.constant 0 : i32
    %9 = arith.cmpi slt, %2, %c0_i32_2 : i32
    %10 = vector.broadcast %9 : i1 to vector<1x1024xi1>
    %11 = vector.broadcast %10 : vector<1x1024xi1> to vector<1x1024xi1>
    %12 = arith.xori %8, %11 : vector<1x1024xi1>
    %13 = arith.andi %12, %6 : vector<1x1024xi1>
    %14 = vector.broadcast %2 : i32 to vector<1x1024xi32>
    %15 = arith.addi %4, %14 : vector<1x1024xi32>
    %16 = arith.select %13, %15, %4 : vector<1x1024xi1>, vector<1x1024xi32>
    %c32_i32 = arith.constant 32 : i32
    %c0_i32_3 = arith.constant 0 : i32
    %17 = arith.cmpi eq, %c32_i32, %c0_i32_3 : i32
    %c1_i32_4 = arith.constant 1 : i32
    %18 = arith.select %17, %c1_i32_4, %c32_i32 : i32
    %19 = vector.broadcast %18 : i32 to vector<1x1024xi32>
    %20 = arith.remsi %0, %19 : vector<1x1024xi32>
    %c0_i32_5 = arith.constant 0 : i32
    %21 = vector.broadcast %c0_i32_5 : i32 to vector<1x1024xi32>
    %22 = arith.cmpi ne, %20, %21 : vector<1x1024xi32>
    %c0_i32_6 = arith.constant 0 : i32
    %23 = vector.broadcast %c0_i32_6 : i32 to vector<1x1024xi32>
    %24 = arith.cmpi slt, %20, %23 : vector<1x1024xi32>
    %c0_i32_7 = arith.constant 0 : i32
    %25 = arith.cmpi slt, %18, %c0_i32_7 : i32
    %26 = vector.broadcast %25 : i1 to vector<1x1024xi1>
    %27 = vector.broadcast %26 : vector<1x1024xi1> to vector<1x1024xi1>
    %28 = arith.xori %24, %27 : vector<1x1024xi1>
    %29 = arith.andi %28, %22 : vector<1x1024xi1>
    %30 = vector.broadcast %18 : i32 to vector<1x1024xi32>
    %31 = arith.addi %20, %30 : vector<1x1024xi32>
    %32 = arith.select %29, %31, %20 : vector<1x1024xi1>, vector<1x1024xi32>
    %c32_i32_8 = arith.constant 32 : i32
    %33 = vector.broadcast %c32_i32_8 : i32 to vector<1x1024xi32>
    %34 = arith.cmpi sge, %16, %33 : vector<1x1024xi32>
    %c480_i32 = arith.constant 480 : i32
    %35 = vector.broadcast %c480_i32 : i32 to vector<1x1024xi32>
    %36 = arith.cmpi slt, %16, %35 : vector<1x1024xi32>
    %c1_i32_9 = arith.constant 1 : i32
    %37 = vector.broadcast %c1_i32_9 : i32 to vector<1x1024xi32>
    %38 = arith.cmpi sge, %32, %37 : vector<1x1024xi32>
    %c31_i32 = arith.constant 31 : i32
    %39 = vector.broadcast %c31_i32 : i32 to vector<1x1024xi32>
    %40 = arith.cmpi slt, %32, %39 : vector<1x1024xi32>
    %c64_i32 = arith.constant 64 : i32
    %41 = vector.broadcast %c64_i32 : i32 to vector<1x1024xi32>
    %42 = arith.cmpi sge, %16, %41 : vector<1x1024xi32>
    %c448_i32 = arith.constant 448 : i32
    %43 = vector.broadcast %c448_i32 : i32 to vector<1x1024xi32>
    %44 = arith.cmpi slt, %16, %43 : vector<1x1024xi32>
    %c2_i32 = arith.constant 2 : i32
    %45 = vector.broadcast %c2_i32 : i32 to vector<1x1024xi32>
    %46 = arith.cmpi sge, %32, %45 : vector<1x1024xi32>
    %c30_i32 = arith.constant 30 : i32
    %47 = vector.broadcast %c30_i32 : i32 to vector<1x1024xi32>
    %48 = arith.cmpi slt, %32, %47 : vector<1x1024xi32>
    %c0 = arith.constant 0 : index
    %c0_10 = arith.constant 0 : index
    %49 = vector.load %arg1[%c0, %c0_10] : memref<8x1024xf32, #tpu.memory_space<vmem>>, vector<8x1024xf32>
    %c32_i32_11 = arith.constant 32 : i32
    %50 = tpu.dynamic_rotate %49 by %c32_i32_11 dim 1 : vector<8x1024xf32>, i32 -> vector<8x1024xf32>
    %cst = arith.constant 0.000000e+00 : f32
    %51 = vector.shape_cast %34 : vector<1x1024xi1> to vector<1x1024xi1>
    %52 = vector.broadcast %51 : vector<1x1024xi1> to vector<8x1024xi1>
    %53 = vector.broadcast %cst : f32 to vector<8x1024xf32>
    %54 = arith.select %52, %50, %53 : vector<8x1024xi1>, vector<8x1024xf32>
    %c992_i32 = arith.constant 992 : i32
    %55 = tpu.dynamic_rotate %49 by %c992_i32 dim 1 : vector<8x1024xf32>, i32 -> vector<8x1024xf32>
    %cst_12 = arith.constant 0.000000e+00 : f32
    %56 = vector.shape_cast %36 : vector<1x1024xi1> to vector<1x1024xi1>
    %57 = vector.broadcast %56 : vector<1x1024xi1> to vector<8x1024xi1>
    %58 = vector.broadcast %cst_12 : f32 to vector<8x1024xf32>
    %59 = arith.select %57, %55, %58 : vector<8x1024xi1>, vector<8x1024xf32>
    %60 = tpu.concatenate %54, %49, %59 in 0 : vector<8x1024xf32>, vector<8x1024xf32>, vector<8x1024xf32> -> vector<24x1024xf32>
    %61 = arith.truncf %60 : vector<24x1024xf32> to vector<24x1024xbf16>
    %c0_13 = arith.constant 0 : index
    %c0_14 = arith.constant 0 : index
    %62 = vector.load %arg2[%c0_13, %c0_14] : memref<8x24xbf16, #tpu.memory_space<vmem>>, vector<8x24xbf16>
    %cst_15 = arith.constant dense<0.000000e+00> : vector<8x1024xf32>
    %63 = tpu.matmul %62, %61, %cst_15 {dimension_numbers = #tpu.dot_dimension_numbers<[1], [0], [0], [1], [0, 0, 1, 1], [], []>} : vector<8x24xbf16>, vector<24x1024xbf16>, vector<8x1024xf32> -> vector<8x1024xf32>
    %c0_16 = arith.constant 0 : index
    %c0_17 = arith.constant 0 : index
    %64 = vector.load %arg3[%c0_16, %c0_17] : memref<8x1xf32, #tpu.memory_space<vmem>>, vector<8x1xf32>
    %65 = vector.broadcast %64 : vector<8x1xf32> to vector<8x1024xf32>
    %66 = arith.addf %63, %65 : vector<8x1024xf32>
    %cst_18 = arith.constant 0.000000e+00 : f32
    %67 = vector.broadcast %cst_18 : f32 to vector<8x1024xf32>
    %68 = arith.maximumf %66, %67 : vector<8x1024xf32>
    %c1_i32_19 = arith.constant 1 : i32
    %69 = tpu.dynamic_rotate %68 by %c1_i32_19 dim 1 : vector<8x1024xf32>, i32 -> vector<8x1024xf32>
    %cst_20 = arith.constant 0.000000e+00 : f32
    %70 = vector.shape_cast %38 : vector<1x1024xi1> to vector<1x1024xi1>
    %71 = vector.broadcast %70 : vector<1x1024xi1> to vector<8x1024xi1>
    %72 = vector.broadcast %cst_20 : f32 to vector<8x1024xf32>
    %73 = arith.select %71, %69, %72 : vector<8x1024xi1>, vector<8x1024xf32>
    %c1023_i32 = arith.constant 1023 : i32
    %74 = tpu.dynamic_rotate %68 by %c1023_i32 dim 1 : vector<8x1024xf32>, i32 -> vector<8x1024xf32>
    %cst_21 = arith.constant 0.000000e+00 : f32
    %75 = vector.shape_cast %40 : vector<1x1024xi1> to vector<1x1024xi1>
    %76 = vector.broadcast %75 : vector<1x1024xi1> to vector<8x1024xi1>
    %77 = vector.broadcast %cst_21 : f32 to vector<8x1024xf32>
    %78 = arith.select %76, %74, %77 : vector<8x1024xi1>, vector<8x1024xf32>
    %79 = tpu.concatenate %73, %68, %78 in 0 : vector<8x1024xf32>, vector<8x1024xf32>, vector<8x1024xf32> -> vector<24x1024xf32>
    %80 = arith.truncf %79 : vector<24x1024xf32> to vector<24x1024xbf16>
    %c0_22 = arith.constant 0 : index
    %c0_23 = arith.constant 0 : index
    %81 = vector.load %arg4[%c0_22, %c0_23] : memref<8x24xbf16, #tpu.memory_space<vmem>>, vector<8x24xbf16>
    %cst_24 = arith.constant dense<0.000000e+00> : vector<8x1024xf32>
    %82 = tpu.matmul %81, %80, %cst_24 {dimension_numbers = #tpu.dot_dimension_numbers<[1], [0], [0], [1], [0, 0, 1, 1], [], []>} : vector<8x24xbf16>, vector<24x1024xbf16>, vector<8x1024xf32> -> vector<8x1024xf32>
    %c0_25 = arith.constant 0 : index
    %c0_26 = arith.constant 0 : index
    %83 = vector.load %arg5[%c0_25, %c0_26] : memref<8x1xf32, #tpu.memory_space<vmem>>, vector<8x1xf32>
    %84 = vector.broadcast %83 : vector<8x1xf32> to vector<8x1024xf32>
    %85 = arith.addf %82, %84 : vector<8x1024xf32>
    %cst_27 = arith.constant 0.000000e+00 : f32
    %86 = vector.broadcast %cst_27 : f32 to vector<8x1024xf32>
    %87 = arith.maximumf %85, %86 : vector<8x1024xf32>
    %c64_i32_28 = arith.constant 64 : i32
    %88 = tpu.dynamic_rotate %87 by %c64_i32_28 dim 1 : vector<8x1024xf32>, i32 -> vector<8x1024xf32>
    %cst_29 = arith.constant 0.000000e+00 : f32
    %89 = vector.shape_cast %42 : vector<1x1024xi1> to vector<1x1024xi1>
    %90 = vector.broadcast %89 : vector<1x1024xi1> to vector<8x1024xi1>
    %91 = vector.broadcast %cst_29 : f32 to vector<8x1024xf32>
    %92 = arith.select %90, %88, %91 : vector<8x1024xi1>, vector<8x1024xf32>
    %c960_i32 = arith.constant 960 : i32
    %93 = tpu.dynamic_rotate %87 by %c960_i32 dim 1 : vector<8x1024xf32>, i32 -> vector<8x1024xf32>
    %cst_30 = arith.constant 0.000000e+00 : f32
    %94 = vector.shape_cast %44 : vector<1x1024xi1> to vector<1x1024xi1>
    %95 = vector.broadcast %94 : vector<1x1024xi1> to vector<8x1024xi1>
    %96 = vector.broadcast %cst_30 : f32 to vector<8x1024xf32>
    %97 = arith.select %95, %93, %96 : vector<8x1024xi1>, vector<8x1024xf32>
    %98 = tpu.concatenate %92, %87, %97 in 0 : vector<8x1024xf32>, vector<8x1024xf32>, vector<8x1024xf32> -> vector<24x1024xf32>
    %99 = arith.truncf %98 : vector<24x1024xf32> to vector<24x1024xbf16>
    %c0_31 = arith.constant 0 : index
    %c0_32 = arith.constant 0 : index
    %100 = vector.load %arg6[%c0_31, %c0_32] : memref<8x24xbf16, #tpu.memory_space<vmem>>, vector<8x24xbf16>
    %cst_33 = arith.constant dense<0.000000e+00> : vector<8x1024xf32>
    %101 = tpu.matmul %100, %99, %cst_33 {dimension_numbers = #tpu.dot_dimension_numbers<[1], [0], [0], [1], [0, 0, 1, 1], [], []>} : vector<8x24xbf16>, vector<24x1024xbf16>, vector<8x1024xf32> -> vector<8x1024xf32>
    %c0_34 = arith.constant 0 : index
    %c0_35 = arith.constant 0 : index
    %102 = vector.load %arg7[%c0_34, %c0_35] : memref<8x1xf32, #tpu.memory_space<vmem>>, vector<8x1xf32>
    %103 = vector.broadcast %102 : vector<8x1xf32> to vector<8x1024xf32>
    %104 = arith.addf %101, %103 : vector<8x1024xf32>
    %cst_36 = arith.constant 0.000000e+00 : f32
    %105 = vector.broadcast %cst_36 : f32 to vector<8x1024xf32>
    %106 = arith.maximumf %104, %105 : vector<8x1024xf32>
    %c2_i32_37 = arith.constant 2 : i32
    %107 = tpu.dynamic_rotate %106 by %c2_i32_37 dim 1 : vector<8x1024xf32>, i32 -> vector<8x1024xf32>
    %cst_38 = arith.constant 0.000000e+00 : f32
    %108 = vector.shape_cast %46 : vector<1x1024xi1> to vector<1x1024xi1>
    %109 = vector.broadcast %108 : vector<1x1024xi1> to vector<8x1024xi1>
    %110 = vector.broadcast %cst_38 : f32 to vector<8x1024xf32>
    %111 = arith.select %109, %107, %110 : vector<8x1024xi1>, vector<8x1024xf32>
    %c1022_i32 = arith.constant 1022 : i32
    %112 = tpu.dynamic_rotate %106 by %c1022_i32 dim 1 : vector<8x1024xf32>, i32 -> vector<8x1024xf32>
    %cst_39 = arith.constant 0.000000e+00 : f32
    %113 = vector.shape_cast %48 : vector<1x1024xi1> to vector<1x1024xi1>
    %114 = vector.broadcast %113 : vector<1x1024xi1> to vector<8x1024xi1>
    %115 = vector.broadcast %cst_39 : f32 to vector<8x1024xf32>
    %116 = arith.select %114, %112, %115 : vector<8x1024xi1>, vector<8x1024xf32>
    %117 = tpu.concatenate %111, %106, %116 in 0 : vector<8x1024xf32>, vector<8x1024xf32>, vector<8x1024xf32> -> vector<24x1024xf32>
    %118 = arith.truncf %117 : vector<24x1024xf32> to vector<24x1024xbf16>
    %c0_40 = arith.constant 0 : index
    %c0_41 = arith.constant 0 : index
    %119 = vector.load %arg8[%c0_40, %c0_41] : memref<8x24xbf16, #tpu.memory_space<vmem>>, vector<8x24xbf16>
    %cst_42 = arith.constant dense<0.000000e+00> : vector<8x1024xf32>
    %120 = tpu.matmul %119, %118, %cst_42 {dimension_numbers = #tpu.dot_dimension_numbers<[1], [0], [0], [1], [0, 0, 1, 1], [], []>} : vector<8x24xbf16>, vector<24x1024xbf16>, vector<8x1024xf32> -> vector<8x1024xf32>
    %c0_43 = arith.constant 0 : index
    %c0_44 = arith.constant 0 : index
    %121 = vector.load %arg9[%c0_43, %c0_44] : memref<8x1xf32, #tpu.memory_space<vmem>>, vector<8x1xf32>
    %122 = vector.broadcast %121 : vector<8x1xf32> to vector<8x1024xf32>
    %123 = arith.addf %120, %122 : vector<8x1024xf32>
    %c0_45 = arith.constant 0 : index
    %c0_46 = arith.constant 0 : index
    %124 = vector.load %arg1[%c0_45, %c0_46] : memref<8x1024xf32, #tpu.memory_space<vmem>>, vector<8x1024xf32>
    %125 = arith.addf %123, %124 : vector<8x1024xf32>
    %cst_47 = arith.constant 0.000000e+00 : f32
    %126 = vector.broadcast %cst_47 : f32 to vector<8x1024xf32>
    %127 = arith.maximumf %125, %126 : vector<8x1024xf32>
    %c0_48 = arith.constant 0 : index
    %c0_49 = arith.constant 0 : index
    %128 = vector.load %arg10[%c0_48, %c0_49] : memref<8x1024xf32, #tpu.memory_space<vmem>>, vector<8x1024xf32>
    tpu.vector_store %arg10[%c0_48, %c0_49], %127 {strides = array<i32>} : memref<8x1024xf32, #tpu.memory_space<vmem>>, vector<8x1024xf32>,
    return
  }
  func.func @transform_0(%arg0: i32) -> (i32, i32) {
    %c0_i32 = arith.constant 0 : i32
    %c0_i32_0 = arith.constant 0 : i32
    return %c0_i32, %arg0 : i32, i32
  }
  func.func @transform_1(%arg0: i32) -> (i32, i32) {
    %c0_i32 = arith.constant 0 : i32
    %c0_i32_0 = arith.constant 0 : i32
    %c0_i32_1 = arith.constant 0 : i32
    return %c0_i32, %c0_i32_0 : i32, i32
  }
  func.func @transform_2(%arg0: i32) -> (i32, i32) {
    %c0_i32 = arith.constant 0 : i32
    %c0_i32_0 = arith.constant 0 : i32
    %c0_i32_1 = arith.constant 0 : i32
    return %c0_i32, %c0_i32_0 : i32, i32
  }
  func.func @transform_3(%arg0: i32) -> (i32, i32) {
    %c0_i32 = arith.constant 0 : i32
    %c0_i32_0 = arith.constant 0 : i32
    %c0_i32_1 = arith.constant 0 : i32
    return %c0_i32, %c0_i32_0 : i32, i32
  }
  func.func @transform_4(%arg0: i32) -> (i32, i32) {
    %c0_i32 = arith.constant 0 : i32
    %c0_i32_0 = arith.constant 0 : i32
    %c0_i32_1 = arith.constant 0 : i32
    return %c0_i32, %c0_i32_0 : i32, i32
  }
  func.func @transform_5(%arg0: i32) -> (i32, i32) {
    %c0_i32 = arith.constant 0 : i32
    %c0_i32_0 = arith.constant 0 : i32
    %c0_i32_1 = arith.constant 0 : i32
    return %c0_i32, %c0_i32_0 : i32, i32
  }
  func.func @transform_6(%arg0: i32) -> (i32, i32) {
    %c0_i32 = arith.constant 0 : i32
    %c0_i32_0 = arith.constant 0 : i32
    %c0_i32_1 = arith.constant 0 : i32
    return %c0_i32, %c0_i32_0 : i32, i32
  }
  func.func @transform_7(%arg0: i32) -> (i32, i32) {
    %c0_i32 = arith.constant 0 : i32
    %c0_i32_0 = arith.constant 0 : i32
    %c0_i32_1 = arith.constant 0 : i32
    return %c0_i32, %c0_i32_0 : i32, i32
  }
  func.func @transform_8(%arg0: i32) -> (i32, i32) {
    %c0_i32 = arith.constant 0 : i32
    %c0_i32_0 = arith.constant 0 : i32
    %c0_i32_1 = arith.constant 0 : i32
    return %c0_i32, %c0_i32_0 : i32, i32
  }
  func.func @transform_9(%arg0: i32) -> (i32, i32) {
    %c0_i32 = arith.constant 0 : i32
    %c0_i32_0 = arith.constant 0 : i32
    return %c0_i32, %arg0 : i32, i32
  }
}

</mosaic_0001>

<llo_original>
// kernel: tpu_custom_call.1
$region0: #{tpu_custom_call.1}
  #allocation0 [shape = 'u32[]', space=smem, size = 0x4, offset = 0x4, fixed_abs, tag = 'smem constant byte address 0x4 - core index']
  #allocation1 [shape = 'u32[144,128]{1,0:T(1,128)}', space=vmem, size = 0x12000, scoped, tag = 'internal scratch']
  %s0 = inlined_call_operand.hbm [shape: f32[8,1024], index: 0, kind: input, shape index: {}]
  %s1 = inlined_call_operand.vmem [shape: bf16[8,24], index: 1, kind: input, shape index: {}]
  %s2 = inlined_call_operand.vmem [shape: f32[8,1], index: 2, kind: input, shape index: {}]
  %s3 = inlined_call_operand.vmem [shape: bf16[8,24], index: 3, kind: input, shape index: {}]
  %s4 = inlined_call_operand.vmem [shape: f32[8,1], index: 4, kind: input, shape index: {}]
  %s5 = inlined_call_operand.vmem [shape: bf16[8,24], index: 5, kind: input, shape index: {}]
  %s6 = inlined_call_operand.vmem [shape: f32[8,1], index: 6, kind: input, shape index: {}]
  %s7 = inlined_call_operand.vmem [shape: bf16[8,24], index: 7, kind: input, shape index: {}]
  %s8 = inlined_call_operand.vmem [shape: f32[8,1], index: 8, kind: input, shape index: {}]
  %s9 = inlined_call_operand.hbm [shape: f32[8,1024], index: 9, kind: output, shape index: {}]
  %s10 = sld [smem:[#allocation0]]
  $region50: #{tpu_custom_call.1} parent=0
    _
  %s12 = ssub.s32 1, %s10
  %s13 = scalar_select 0, %s12, %s10
  $region1: #{tpu_custom_call.1} parent=0
    #allocation2 [shape = 'u8[32768]{0}', space=vmem, size = 0x8000, scoped, tag = 'input window, operand 0, single buffered']
    #allocation3 [shape = 's32[1]{0}', space=sflag, size = 0x4, scoped, tag = 'scoped memory for tpu_custom_call.1']
    #allocation4 [shape = 's32[1]{0}', space=sflag, size = 0x4, scoped, tag = 'scoped memory for tpu_custom_call.1']
    #allocation5 [shape = 'u8[32768]{0}', space=vmem, size = 0x8000, scoped, tag = 'output window, operand 0, single buffered']
    %14 = vsyncpa [#allocation3], 0
    %15 = vsyncpa [#allocation4], 0
    // Predicated region
    $region2: #{tpu_custom_call.1} parent=1 // pred_check
      _
    $region3: #{tpu_custom_call.1} parent=1 // pred_check_branch
      %17 = sbr.rel (0) target = $region5
    $region4: #{tpu_custom_call.1} parent=1 // pred_region
      %s19 = ssub.s32 1024, 1024
      %20 = vsyncadd [#allocation3], %s19
      %s22 = sshll.u32 [#allocation2], 4
      %s23 = int_to_ptr.vmem [resolvable:$true] %s22
      %25 = dma.hbm_to_vmem [thread:$0]  %s0, 1024, %s23, [#allocation3]
    $region5: #{tpu_custom_call.1} parent=1 // pred_fallthru
      _
    // Predicated region
    $region6: #{tpu_custom_call.1} parent=1 // pred_check
      _
    $region7: #{tpu_custom_call.1} parent=1 // pred_check_branch
      %27 = sbr.rel (0) target = $region9
    $region8: #{tpu_custom_call.1} parent=1 // pred_region
      _
    $region9: #{tpu_custom_call.1} parent=1 // pred_fallthru
      _
    // Predicated region
    $region10: #{tpu_custom_call.1} parent=1 // pred_check
      _
    $region11: #{tpu_custom_call.1} parent=1 // pred_check_branch
      %29 = sbr.rel (0) target = $region13
    $region12: #{tpu_custom_call.1} parent=1 // pred_region
      _
    $region13: #{tpu_custom_call.1} parent=1 // pred_fallthru
      _
    // Predicated region
    $region14: #{tpu_custom_call.1} parent=1 // pred_check
      _
    $region15: #{tpu_custom_call.1} parent=1 // pred_check_branch
      %31 = sbr.rel (0) target = $region17
    $region16: #{tpu_custom_call.1} parent=1 // pred_region
      _
    $region17: #{tpu_custom_call.1} parent=1 // pred_fallthru
      _
    // Predicated region
    $region18: #{tpu_custom_call.1} parent=1 // pred_check
      _
    $region19: #{tpu_custom_call.1} parent=1 // pred_check_branch
      %33 = sbr.rel (0) target = $region21
    $region20: #{tpu_custom_call.1} parent=1 // pred_region
      _
    $region21: #{tpu_custom_call.1} parent=1 // pred_fallthru
      _
    // Predicated region
    $region22: #{tpu_custom_call.1} parent=1 // pred_check
      _
    $region23: #{tpu_custom_call.1} parent=1 // pred_check_branch
      %35 = sbr.rel (0) target = $region25
    $region24: #{tpu_custom_call.1} parent=1 // pred_region
      _
    $region25: #{tpu_custom_call.1} parent=1 // pred_fallthru
      _
    // Predicated region
    $region26: #{tpu_custom_call.1} parent=1 // pred_check
      _
    $region27: #{tpu_custom_call.1} parent=1 // pred_check_branch
      %37 = sbr.rel (0) target = $region29
    $region28: #{tpu_custom_call.1} parent=1 // pred_region
      _
    $region29: #{tpu_custom_call.1} parent=1 // pred_fallthru
      _
    // Predicated region
    $region30: #{tpu_custom_call.1} parent=1 // pred_check
      _
    $region31: #{tpu_custom_call.1} parent=1 // pred_check_branch
      %39 = sbr.rel (0) target = $region33
    $region32: #{tpu_custom_call.1} parent=1 // pred_region
      _
    $region33: #{tpu_custom_call.1} parent=1 // pred_fallthru
      _
    // Predicated region
    $region34: #{tpu_custom_call.1} parent=1 // pred_check
      _
    $region35: #{tpu_custom_call.1} parent=1 // pred_check_branch
      %41 = sbr.rel (0) target = $region37
    $region36: #{tpu_custom_call.1} parent=1 // pred_region
      _
    $region37: #{tpu_custom_call.1} parent=1 // pred_fallthru
      _
    // Predicated region
    $region38: #{tpu_custom_call.1} parent=1 // pred_check
      _
    $region39: #{tpu_custom_call.1} parent=1 // pred_check_branch
      %43 = sbr.rel (0) target = $region41
    $region40: #{tpu_custom_call.1} parent=1 // pred_region
      %44 = dma.done [#allocation3], 1024
    $region41: #{tpu_custom_call.1} parent=1 // pred_fallthru
      _
    %v46 = vlaneseq
    %v47 = vand.u32 %v46, 127
    %v48 = vadd.s32 %v47, 128
    %v49 = vadd.s32 %v47, 256
    %v50 = vadd.s32 %v47, 384
    %v51 = vadd.s32 %v47, 512
    %v52 = vadd.s32 %v47, 640
    %v53 = vadd.s32 %v47, 768
    %v54 = vadd.s32 %v47, 896
    %vm55 = vcmp.lt.s32.totalorder %v47, 0
    %v56 = vsub.s32 0, %v47
    %v57 = vsel %vm55, %v56, %v47
    %v58 = vshrl.u32 %v57, 9
    %v59 = vand.u32 %v57, 511
    %v60 = vsub.s32 0, %v59
    %v61 = vsel %vm55, %v60, %v59
    %vm62 = vcmp.lt.s32.totalorder %v48, 0
    %v63 = vsub.s32 0, %v48
    %v64 = vsel %vm62, %v63, %v48
    %v65 = vshrl.u32 %v64, 9
    %v66 = vand.u32 %v64, 511
    %v67 = vsub.s32 0, %v66
    %v68 = vsel %vm62, %v67, %v66
    %vm69 = vcmp.lt.s32.totalorder %v49, 0
    %v70 = vsub.s32 0, %v49
    %v71 = vsel %vm69, %v70, %v49
    %v72 = vshrl.u32 %v71, 9
    %v73 = vand.u32 %v71, 511
    %v74 = vsub.s32 0, %v73
    %v75 = vsel %vm69, %v74, %v73
    %vm76 = vcmp.lt.s32.totalorder %v50, 0
    %v77 = vsub.s32 0, %v50
    %v78 = vsel %vm76, %v77, %v50
    %v79 = vshrl.u32 %v78, 9
    %v80 = vand.u32 %v78, 511
    %v81 = vsub.s32 0, %v80
    %v82 = vsel %vm76, %v81, %v80
    %vm83 = vcmp.lt.s32.totalorder %v51, 0
    %v84 = vsub.s32 0, %v51
    %v85 = vsel %vm83, %v84, %v51
    %v86 = vshrl.u32 %v85, 9
    %v87 = vand.u32 %v85, 511
    %v88 = vsub.s32 0, %v87
    %v89 = vsel %vm83, %v88, %v87
    %vm90 = vcmp.lt.s32.totalorder %v52, 0
    %v91 = vsub.s32 0, %v52
    %v92 = vsel %vm90, %v91, %v52
    %v93 = vshrl.u32 %v92, 9
    %v94 = vand.u32 %v92, 511
    %v95 = vsub.s32 0, %v94
    %v96 = vsel %vm90, %v95, %v94
    %vm97 = vcmp.lt.s32.totalorder %v53, 0
    %v98 = vsub.s32 0, %v53
    %v99 = vsel %vm97, %v98, %v53
    %v100 = vshrl.u32 %v99, 9
    %v101 = vand.u32 %v99, 511
    %v102 = vsub.s32 0, %v101
    %v103 = vsel %vm97, %v102, %v101
    %vm104 = vcmp.lt.s32.totalorder %v54, 0
    %v105 = vsub.s32 0, %v54
    %v106 = vsel %vm104, %v105, %v54
    %v107 = vshrl.u32 %v106, 9
    %v108 = vand.u32 %v106, 511
    %v109 = vsub.s32 0, %v108
    %v110 = vsel %vm104, %v109, %v108
    %vm111 = vcmp.ne.s32.totalorder %v61, 0
    %vm112 = vcmp.ne.s32.totalorder %v68, 0
    %vm113 = vcmp.ne.s32.totalorder %v75, 0
    %vm114 = vcmp.ne.s32.totalorder %v82, 0
    %vm115 = vcmp.ne.s32.totalorder %v89, 0
    %vm116 = vcmp.ne.s32.totalorder %v96, 0
    %vm117 = vcmp.ne.s32.totalorder %v103, 0
    %vm118 = vcmp.ne.s32.totalorder %v110, 0
    %vm119 = vcmp.lt.s32.totalorder %v61, 0
    %vm120 = vcmp.lt.s32.totalorder %v68, 0
    %vm121 = vcmp.lt.s32.totalorder %v75, 0
    %vm122 = vcmp.lt.s32.totalorder %v82, 0
    %vm123 = vcmp.lt.s32.totalorder %v89, 0
    %vm124 = vcmp.lt.s32.totalorder %v96, 0
    %vm125 = vcmp.lt.s32.totalorder %v103, 0
    %vm126 = vcmp.lt.s32.totalorder %v110, 0
    %vm127 = vmand %vm119, %vm111
    %vm128 = vmand %vm120, %vm112
    %vm129 = vmand %vm121, %vm113
    %vm130 = vmand %vm122, %vm114
    %vm131 = vmand %vm123, %vm115
    %vm132 = vmand %vm124, %vm116
    %vm133 = vmand %vm125, %vm117
    %vm134 = vmand %vm126, %vm118
    %v135 = vadd.s32 %v61, 512
    %v136 = vadd.s32 %v68, 512
    %v137 = vadd.s32 %v75, 512
    %v138 = vadd.s32 %v82, 512
    %v139 = vadd.s32 %v89, 512
    %v140 = vadd.s32 %v96, 512
    %v141 = vadd.s32 %v103, 512
    %v142 = vadd.s32 %v110, 512
    %v143 = vsel %vm127, %v135, %v61
    %v144 = vsel %vm128, %v136, %v68
    %v145 = vsel %vm129, %v137, %v75
    %v146 = vsel %vm130, %v138, %v82
    %v147 = vsel %vm131, %v139, %v89
    %v148 = vsel %vm132, %v140, %v96
    %v149 = vsel %vm133, %v141, %v103
    %v150 = vsel %vm134, %v142, %v110
    %vm151 = vcmp.lt.s32.totalorder %v47, 0
    %v152 = vsub.s32 0, %v47
    %v153 = vsel %vm151, %v152, %v47
    %v154 = vshrl.u32 %v153, 5
    %v155 = vand.u32 %v153, 31
    %v156 = vsub.s32 0, %v155
    %v157 = vsel %vm151, %v156, %v155
    %vm158 = vcmp.lt.s32.totalorder %v48, 0
    %v159 = vsub.s32 0, %v48
    %v160 = vsel %vm158, %v159, %v48
    %v161 = vshrl.u32 %v160, 5
    %v162 = vand.u32 %v160, 31
    %v163 = vsub.s32 0, %v162
    %v164 = vsel %vm158, %v163, %v162
    %vm165 = vcmp.lt.s32.totalorder %v49, 0
    %v166 = vsub.s32 0, %v49
    %v167 = vsel %vm165, %v166, %v49
    %v168 = vshrl.u32 %v167, 5
    %v169 = vand.u32 %v167, 31
    %v170 = vsub.s32 0, %v169
    %v171 = vsel %vm165, %v170, %v169
    %vm172 = vcmp.lt.s32.totalorder %v50, 0
    %v173 = vsub.s32 0, %v50
    %v174 = vsel %vm172, %v173, %v50
    %v175 = vshrl.u32 %v174, 5
    %v176 = vand.u32 %v174, 31
    %v177 = vsub.s32 0, %v176
    %v178 = vsel %vm172, %v177, %v176
    %vm179 = vcmp.lt.s32.totalorder %v51, 0
    %v180 = vsub.s32 0, %v51
    %v181 = vsel %vm179, %v180, %v51
    %v182 = vshrl.u32 %v181, 5
    %v183 = vand.u32 %v181, 31
    %v184 = vsub.s32 0, %v183
    %v185 = vsel %vm179, %v184, %v183
    %vm186 = vcmp.lt.s32.totalorder %v52, 0
    %v187 = vsub.s32 0, %v52
    %v188 = vsel %vm186, %v187, %v52
    %v189 = vshrl.u32 %v188, 5
    %v190 = vand.u32 %v188, 31
    %v191 = vsub.s32 0, %v190
    %v192 = vsel %vm186, %v191, %v190
    %vm193 = vcmp.lt.s32.totalorder %v53, 0
    %v194 = vsub.s32 0, %v53
    %v195 = vsel %vm193, %v194, %v53
    %v196 = vshrl.u32 %v195, 5
    %v197 = vand.u32 %v195, 31
    %v198 = vsub.s32 0, %v197
    %v199 = vsel %vm193, %v198, %v197
    %vm200 = vcmp.lt.s32.totalorder %v54, 0
    %v201 = vsub.s32 0, %v54
    %v202 = vsel %vm200, %v201, %v54
    %v203 = vshrl.u32 %v202, 5
    %v204 = vand.u32 %v202, 31
    %v205 = vsub.s32 0, %v204
    %v206 = vsel %vm200, %v205, %v204
    %vm207 = vcmp.ne.s32.totalorder %v157, 0
    %vm208 = vcmp.ne.s32.totalorder %v164, 0
    %vm209 = vcmp.ne.s32.totalorder %v171, 0
    %vm210 = vcmp.ne.s32.totalorder %v178, 0
    %vm211 = vcmp.ne.s32.totalorder %v185, 0
    %vm212 = vcmp.ne.s32.totalorder %v192, 0
    %vm213 = vcmp.ne.s32.totalorder %v199, 0
    %vm214 = vcmp.ne.s32.totalorder %v206, 0
    %vm215 = vcmp.lt.s32.totalorder %v157, 0
    %vm216 = vcmp.lt.s32.totalorder %v164, 0
    %vm217 = vcmp.lt.s32.totalorder %v171, 0
    %vm218 = vcmp.lt.s32.totalorder %v178, 0
    %vm219 = vcmp.lt.s32.totalorder %v185, 0
    %vm220 = vcmp.lt.s32.totalorder %v192, 0
    %vm221 = vcmp.lt.s32.totalorder %v199, 0
    %vm222 = vcmp.lt.s32.totalorder %v206, 0
    %vm223 = vmand %vm215, %vm207
    %vm224 = vmand %vm216, %vm208
    %vm225 = vmand %vm217, %vm209
    %vm226 = vmand %vm218, %vm210
    %vm227 = vmand %vm219, %vm211
    %vm228 = vmand %vm220, %vm212
    %vm229 = vmand %vm221, %vm213
    %vm230 = vmand %vm222, %vm214
    %v231 = vadd.s32 %v157, 32
    %v232 = vadd.s32 %v164, 32
    %v233 = vadd.s32 %v171, 32
    %v234 = vadd.s32 %v178, 32
    %v235 = vadd.s32 %v185, 32
    %v236 = vadd.s32 %v192, 32
    %v237 = vadd.s32 %v199, 32
    %v238 = vadd.s32 %v206, 32
    %v239 = vsel %vm223, %v231, %v157
    %v240 = vsel %vm224, %v232, %v164
    %v241 = vsel %vm225, %v233, %v171
    %v242 = vsel %vm226, %v234, %v178
    %v243 = vsel %vm227, %v235, %v185
    %v244 = vsel %vm228, %v236, %v192
    %v245 = vsel %vm229, %v237, %v199
    %v246 = vsel %vm230, %v238, %v206
    %vm247 = vcmp.ge.s32.totalorder %v143, 32
    %vm248 = vcmp.ge.s32.totalorder %v144, 32
    %vm249 = vcmp.ge.s32.totalorder %v145, 32
    %vm250 = vcmp.ge.s32.totalorder %v146, 32
    %vm251 = vcmp.ge.s32.totalorder %v147, 32
    %vm252 = vcmp.ge.s32.totalorder %v148, 32
    %vm253 = vcmp.ge.s32.totalorder %v149, 32
    %vm254 = vcmp.ge.s32.totalorder %v150, 32
    %vm255 = vcmp.lt.s32.totalorder %v143, 480
    %vm256 = vcmp.lt.s32.totalorder %v144, 480
    %vm257 = vcmp.lt.s32.totalorder %v145, 480
    %vm258 = vcmp.lt.s32.totalorder %v146, 480
    %vm259 = vcmp.lt.s32.totalorder %v147, 480
    %vm260 = vcmp.lt.s32.totalorder %v148, 480
    %vm261 = vcmp.lt.s32.totalorder %v149, 480
    %vm262 = vcmp.lt.s32.totalorder %v150, 480
    %vm263 = vcmp.ge.s32.totalorder %v239, 1
    %vm264 = vcmp.ge.s32.totalorder %v240, 1
    %vm265 = vcmp.ge.s32.totalorder %v241, 1
    %vm266 = vcmp.ge.s32.totalorder %v242, 1
    %vm267 = vcmp.ge.s32.totalorder %v243, 1
    %vm268 = vcmp.ge.s32.totalorder %v244, 1
    %vm269 = vcmp.ge.s32.totalorder %v245, 1
    %vm270 = vcmp.ge.s32.totalorder %v246, 1
    %vm271 = vcmp.lt.s32.totalorder %v239, 31
    %vm272 = vcmp.lt.s32.totalorder %v240, 31
    %vm273 = vcmp.lt.s32.totalorder %v241, 31
    %vm274 = vcmp.lt.s32.totalorder %v242, 31
    %vm275 = vcmp.lt.s32.totalorder %v243, 31
    %vm276 = vcmp.lt.s32.totalorder %v244, 31
    %vm277 = vcmp.lt.s32.totalorder %v245, 31
    %vm278 = vcmp.lt.s32.totalorder %v246, 31
    %vm279 = vcmp.ge.s32.totalorder %v143, 64
    %vm280 = vcmp.ge.s32.totalorder %v144, 64
    %vm281 = vcmp.ge.s32.totalorder %v145, 64
    %vm282 = vcmp.ge.s32.totalorder %v146, 64
    %vm283 = vcmp.ge.s32.totalorder %v147, 64
    %vm284 = vcmp.ge.s32.totalorder %v148, 64
    %vm285 = vcmp.ge.s32.totalorder %v149, 64
    %vm286 = vcmp.ge.s32.totalorder %v150, 64
    %vm287 = vcmp.lt.s32.totalorder %v143, 448
    %vm288 = vcmp.lt.s32.totalorder %v144, 448
    %vm289 = vcmp.lt.s32.totalorder %v145, 448
    %vm290 = vcmp.lt.s32.totalorder %v146, 448
    %vm291 = vcmp.lt.s32.totalorder %v147, 448
    %vm292 = vcmp.lt.s32.totalorder %v148, 448
    %vm293 = vcmp.lt.s32.totalorder %v149, 448
    %vm294 = vcmp.lt.s32.totalorder %v150, 448
    %vm295 = vcmp.ge.s32.totalorder %v239, 2
    %vm296 = vcmp.ge.s32.totalorder %v240, 2
    %vm297 = vcmp.ge.s32.totalorder %v241, 2
    %vm298 = vcmp.ge.s32.totalorder %v242, 2
    %vm299 = vcmp.ge.s32.totalorder %v243, 2
    %vm300 = vcmp.ge.s32.totalorder %v244, 2
    %vm301 = vcmp.ge.s32.totalorder %v245, 2
    %vm302 = vcmp.ge.s32.totalorder %v246, 2
    %vm303 = vcmp.lt.s32.totalorder %v239, 30
    %vm304 = vcmp.lt.s32.totalorder %v240, 30
    %vm305 = vcmp.lt.s32.totalorder %v241, 30
    %vm306 = vcmp.lt.s32.totalorder %v242, 30
    %vm307 = vcmp.lt.s32.totalorder %v243, 30
    %vm308 = vcmp.lt.s32.totalorder %v244, 30
    %vm309 = vcmp.lt.s32.totalorder %v245, 30
    %vm310 = vcmp.lt.s32.totalorder %v246, 30
    %v311 = vld [vmem:[#allocation2] sm:$0xff]
    %v312 = vld [vmem:[#allocation2 + $0x8] sm:$0xff]
    %v313 = vld [vmem:[#allocation2 + $0x10] sm:$0xff]
    %v314 = vld [vmem:[#allocation2 + $0x18] sm:$0xff]
    %v315 = vld [vmem:[#allocation2 + $0x20] sm:$0xff]
    %v316 = vld [vmem:[#allocation2 + $0x28] sm:$0xff]
    %v317 = vld [vmem:[#allocation2 + $0x30] sm:$0xff]
    %v318 = vld [vmem:[#allocation2 + $0x38] sm:$0xff]
    %319 = vrot.lane.b32.xlu0 %v311, 32
    %v320 = vpop.permute.xlu0 %319
    %321 = vrot.lane.b32.xlu0 %v312, 32
    %v322 = vpop.permute.xlu0 %321
    %323 = vrot.lane.b32.xlu0 %v313, 32
    %v324 = vpop.permute.xlu0 %323
    %325 = vrot.lane.b32.xlu0 %v314, 32
    %v326 = vpop.permute.xlu0 %325
    %327 = vrot.lane.b32.xlu0 %v315, 32
    %v328 = vpop.permute.xlu0 %327
    %329 = vrot.lane.b32.xlu0 %v316, 32
    %v330 = vpop.permute.xlu0 %329
    %331 = vrot.lane.b32.xlu0 %v317, 32
    %v332 = vpop.permute.xlu0 %331
    %333 = vrot.lane.b32.xlu0 %v318, 32
    %v334 = vpop.permute.xlu0 %333
    %vm335 = vcmp.lt.s32.totalorder %v47, 32
    %v336 = vsel %vm335, %v332, %v334
    %v337 = vsel %vm335, %v330, %v332
    %v338 = vsel %vm335, %v328, %v330
    %v339 = vsel %vm335, %v326, %v328
    %v340 = vsel %vm335, %v324, %v326
    %v341 = vsel %vm335, %v322, %v324
    %v342 = vsel %vm335, %v320, %v322
    %v343 = vsel %vm335, %v334, %v320
    %v344 = vsel %vm247, 1, 0
    %v345 = vsel %vm248, 1, 0
    %v346 = vsel %vm249, 1, 0
    %v347 = vsel %vm250, 1, 0
    %v348 = vsel %vm251, 1, 0
    %v349 = vsel %vm252, 1, 0
    %v350 = vsel %vm253, 1, 0
    %v351 = vsel %vm254, 1, 0
    %vm352 = vcmp.eq.s32.totalorder %v344, 1
    %vm353 = vcmp.eq.s32.totalorder %v345, 1
    %vm354 = vcmp.eq.s32.totalorder %v346, 1
    %vm355 = vcmp.eq.s32.totalorder %v347, 1
    %vm356 = vcmp.eq.s32.totalorder %v348, 1
    %vm357 = vcmp.eq.s32.totalorder %v349, 1
    %vm358 = vcmp.eq.s32.totalorder %v350, 1
    %vm359 = vcmp.eq.s32.totalorder %v351, 1
    %v360 = vsel %vm352, %v343, 0.0
    %v361 = vsel %vm353, %v342, 0.0
    %v362 = vsel %vm354, %v341, 0.0
    %v363 = vsel %vm355, %v340, 0.0
    %v364 = vsel %vm356, %v339, 0.0
    %v365 = vsel %vm357, %v338, 0.0
    %v366 = vsel %vm358, %v337, 0.0
    %v367 = vsel %vm359, %v336, 0.0
    %368 = vrot.lane.b32.xlu0 %v311, 96
    %v369 = vpop.permute.xlu0 %368
    %370 = vrot.lane.b32.xlu0 %v312, 96
    %v371 = vpop.permute.xlu0 %370
    %372 = vrot.lane.b32.xlu0 %v313, 96
    %v373 = vpop.permute.xlu0 %372
    %374 = vrot.lane.b32.xlu0 %v314, 96
    %v375 = vpop.permute.xlu0 %374
    %376 = vrot.lane.b32.xlu0 %v315, 96
    %v377 = vpop.permute.xlu0 %376
    %378 = vrot.lane.b32.xlu0 %v316, 96
    %v379 = vpop.permute.xlu0 %378
    %380 = vrot.lane.b32.xlu0 %v317, 96
    %v381 = vpop.permute.xlu0 %380
    %382 = vrot.lane.b32.xlu0 %v318, 96
    %v383 = vpop.permute.xlu0 %382
    %vm384 = vcmp.lt.s32.totalorder %v47, 96
    %v385 = vsel %vm384, %v381, %v383
    %v386 = vsel %vm384, %v379, %v381
    %v387 = vsel %vm384, %v377, %v379
    %v388 = vsel %vm384, %v375, %v377
    %v389 = vsel %vm384, %v373, %v375
    %v390 = vsel %vm384, %v371, %v373
    %v391 = vsel %vm384, %v369, %v371
    %v392 = vsel %vm384, %v383, %v369
    %v393 = vsel %vm255, 1, 0
    %v394 = vsel %vm256, 1, 0
    %v395 = vsel %vm257, 1, 0
    %v396 = vsel %vm258, 1, 0
    %v397 = vsel %vm259, 1, 0
    %v398 = vsel %vm260, 1, 0
    %v399 = vsel %vm261, 1, 0
    %v400 = vsel %vm262, 1, 0
    %vm401 = vcmp.eq.s32.totalorder %v393, 1
    %vm402 = vcmp.eq.s32.totalorder %v394, 1
    %vm403 = vcmp.eq.s32.totalorder %v395, 1
    %vm404 = vcmp.eq.s32.totalorder %v396, 1
    %vm405 = vcmp.eq.s32.totalorder %v397, 1
    %vm406 = vcmp.eq.s32.totalorder %v398, 1
    %vm407 = vcmp.eq.s32.totalorder %v399, 1
    %vm408 = vcmp.eq.s32.totalorder %v400, 1
    %v409 = vsel %vm401, %v391, 0.0
    %v410 = vsel %vm402, %v390, 0.0
    %v411 = vsel %vm403, %v389, 0.0
    %v412 = vsel %vm404, %v388, 0.0
    %v413 = vsel %vm405, %v387, 0.0
    %v414 = vsel %vm406, %v386, 0.0
    %v415 = vsel %vm407, %v385, 0.0
    %v416 = vsel %vm408, %v392, 0.0
    %v417 = vpack.c.bf16 %v311, %v360
    %v418 = vpack.c.bf16 %v312, %v361
    %v419 = vpack.c.bf16 %v313, %v362
    %v420 = vpack.c.bf16 %v314, %v363
    %v421 = vpack.c.bf16 %v315, %v364
    %v422 = vpack.c.bf16 %v316, %v365
    %v423 = vpack.c.bf16 %v317, %v366
    %v424 = vpack.c.bf16 %v318, %v367
    %v425 = vpack.c.bf16 %v409, %v409
    %v426 = vpack.c.bf16 %v410, %v410
    %v427 = vpack.c.bf16 %v411, %v411
    %v428 = vpack.c.bf16 %v412, %v412
    %v429 = vpack.c.bf16 %v413, %v413
    %v430 = vpack.c.bf16 %v414, %v414
    %v431 = vpack.c.bf16 %v415, %v415
    %v432 = vpack.c.bf16 %v416, %v416
    %v433 = vld [vmem:[%s1] sm:$0xf]
    %v434 = vld [vmem:[%s2] sm:$0xff]
    %436 = vset.pattern.permute.xlu0 0
    %437 = vperm.xlu0 %436, %v434
    %v438 = vpop.permute.xlu0 %437
    %vm440 = vcmask 195584
    %v442 = vsel %vm440, %v433, 0
    %vm444 = vcmask 1043456
    %v446 = vsel %vm444, %v425, 0
    %v449 = vsel %vm444, %v426, 0
    %v452 = vsel %vm444, %v427, 0
    %v455 = vsel %vm444, %v428, 0
    %v458 = vsel %vm444, %v429, 0
    %v461 = vsel %vm444, %v430, 0
    %v464 = vsel %vm444, %v431, 0
    %v467 = vsel %vm444, %v432, 0
    %469 = vmatprep.subr.bf16.mxu0 %v418
    %470 = vmatpush1.bf16.msra.mxu0 %v417
    %471 = vmatprep.subr.bf16.mxu0 %v449
    %472 = vmatpush1.bf16.msra.mxu0 %v446
    %473 = vmatprep.subr.bf16.mxu0 0
    %474 = vmatpush1.bf16.msra.mxu0 0
    %475 = vmatprep.subr.bf16.mxu0 0
    %476 = vmatpush1.bf16.msra.mxu0 0
    %477 = vmatprep.subr.bf16.mxu0 0
    %478 = vmatpush1.bf16.msra.mxu0 0
    %479 = vmatprep.subr.bf16.mxu0 0
    %480 = vmatpush1.bf16.msra.mxu0 0
    %481 = vmatprep.subr.bf16.mxu0 0
    %482 = vmatpush1.bf16.msra.mxu0 0
    %483 = vmatprep.subr.bf16.mxu0 0
    %484 = vmatpush1.bf16.msra.mxu0 0
    %485 = vmatprep.subr.bf16.mxu0 0
    %486 = vmatpush1.bf16.msra.mxu0 0
    %487 = vmatprep.subr.bf16.mxu0 0
    %488 = vmatpush1.bf16.msra.mxu0 0
    %489 = vmatprep.subr.bf16.mxu0 0
    %490 = vmatpush1.bf16.msra.mxu0 0
    %491 = vmatprep.subr.bf16.mxu0 0
    %492 = vmatpush1.bf16.msra.mxu0 0
    %493 = vmatprep.subr.bf16.mxu0 0
    %494 = vmatpush1.bf16.msra.mxu0 0
    %495 = vmatprep.subr.bf16.mxu0 0
    %496 = vmatpush1.bf16.msra.mxu0 0
    %497 = vmatprep.subr.bf16.mxu0 0
    %498 = vmatpush1.bf16.msra.mxu0 0
    %499 = vmatprep.subr.bf16.mxu0 0
    %500 = vmatpush1.bf16.msra.mxu0 0
    %501 = vmatprep.mubr.bf16.mxu0 0
    %502 = vmatmul.mubr.bf16.gmra.mrb[0].mxu0 %v442
    %v503 = vpop.f32.mrb[0].mxu0
    %v504 = vadd.f32 %v438, %v503
    %v505 = vpop.f32.mrb[0].mxu0
    %v506 = vadd.f32 %v438, %v505
    %v507 = vpop.f32.mrb[0].mxu0
    %v508 = vpop.f32.mrb[0].mxu0
    %509 = vdwg.mxu0
    %510 = vmatprep.subr.bf16.mxu0 %v420
    %511 = vmatpush1.bf16.msra.mxu0 %v419
    %512 = vmatprep.subr.bf16.mxu0 %v455
    %513 = vmatpush1.bf16.msra.mxu0 %v452
    %514 = vmatprep.subr.bf16.mxu0 0
    %515 = vmatpush1.bf16.msra.mxu0 0
    %516 = vmatprep.subr.bf16.mxu0 0
    %517 = vmatpush1.bf16.msra.mxu0 0
    %518 = vmatprep.subr.bf16.mxu0 0
    %519 = vmatpush1.bf16.msra.mxu0 0
    %520 = vmatprep.subr.bf16.mxu0 0
    %521 = vmatpush1.bf16.msra.mxu0 0
    %522 = vmatprep.subr.bf16.mxu0 0
    %523 = vmatpush1.bf16.msra.mxu0 0
    %524 = vmatprep.subr.bf16.mxu0 0
    %525 = vmatpush1.bf16.msra.mxu0 0
    %526 = vmatprep.subr.bf16.mxu0 0
    %527 = vmatpush1.bf16.msra.mxu0 0
    %528 = vmatprep.subr.bf16.mxu0 0
    %529 = vmatpush1.bf16.msra.mxu0 0
    %530 = vmatprep.subr.bf16.mxu0 0
    %531 = vmatpush1.bf16.msra.mxu0 0
    %532 = vmatprep.subr.bf16.mxu0 0
    %533 = vmatpush1.bf16.msra.mxu0 0
    %534 = vmatprep.subr.bf16.mxu0 0
    %535 = vmatpush1.bf16.msra.mxu0 0
    %536 = vmatprep.subr.bf16.mxu0 0
    %537 = vmatpush1.bf16.msra.mxu0 0
    %538 = vmatprep.subr.bf16.mxu0 0
    %539 = vmatpush1.bf16.msra.mxu0 0
    %540 = vmatprep.subr.bf16.mxu0 0
    %541 = vmatpush1.bf16.msra.mxu0 0
    %542 = vmatprep.mubr.bf16.mxu0 0
    %543 = vmatmul.mubr.bf16.gmra.mrb[0].mxu0 %v442
    %v544 = vpop.f32.mrb[0].mxu0
    %v545 = vadd.f32 %v438, %v544
    %v546 = vpop.f32.mrb[0].mxu0
    %v547 = vadd.f32 %v438, %v546
    %v548 = vpop.f32.mrb[0].mxu0
    %v549 = vpop.f32.mrb[0].mxu0
    %550 = vdwg.mxu0
    %551 = vmatprep.subr.bf16.mxu0 %v422
    %552 = vmatpush1.bf16.msra.mxu0 %v421
    %553 = vmatprep.subr.bf16.mxu0 %v461
    %554 = vmatpush1.bf16.msra.mxu0 %v458
    %555 = vmatprep.subr.bf16.mxu0 0
    %556 = vmatpush1.bf16.msra.mxu0 0
    %557 = vmatprep.subr.bf16.mxu0 0
    %558 = vmatpush1.bf16.msra.mxu0 0
    %559 = vmatprep.subr.bf16.mxu0 0
    %560 = vmatpush1.bf16.msra.mxu0 0
    %561 = vmatprep.subr.bf16.mxu0 0
    %562 = vmatpush1.bf16.msra.mxu0 0
    %563 = vmatprep.subr.bf16.mxu0 0
    %564 = vmatpush1.bf16.msra.mxu0 0
    %565 = vmatprep.subr.bf16.mxu0 0
    %566 = vmatpush1.bf16.msra.mxu0 0
    %567 = vmatprep.subr.bf16.mxu0 0
    %568 = vmatpush1.bf16.msra.mxu0 0
    %569 = vmatprep.subr.bf16.mxu0 0
    %570 = vmatpush1.bf16.msra.mxu0 0
    %571 = vmatprep.subr.bf16.mxu0 0
    %572 = vmatpush1.bf16.msra.mxu0 0
    %573 = vmatprep.subr.bf16.mxu0 0
    %574 = vmatpush1.bf16.msra.mxu0 0
    %575 = vmatprep.subr.bf16.mxu0 0
    %576 = vmatpush1.bf16.msra.mxu0 0
    %577 = vmatprep.subr.bf16.mxu0 0
    %578 = vmatpush1.bf16.msra.mxu0 0
    %579 = vmatprep.subr.bf16.mxu0 0
    %580 = vmatpush1.bf16.msra.mxu0 0
    %581 = vmatprep.subr.bf16.mxu0 0
    %582 = vmatpush1.bf16.msra.mxu0 0
    %583 = vmatprep.mubr.bf16.mxu0 0
    %584 = vmatmul.mubr.bf16.gmra.mrb[0].mxu0 %v442
    %v585 = vpop.f32.mrb[0].mxu0
    %v586 = vadd.f32 %v438, %v585
    %v587 = vpop.f32.mrb[0].mxu0
    %v588 = vadd.f32 %v438, %v587
    %v589 = vpop.f32.mrb[0].mxu0
    %v590 = vpop.f32.mrb[0].mxu0
    %591 = vdwg.mxu0
    %592 = vmatprep.subr.bf16.mxu0 %v424
    %593 = vmatpush1.bf16.msra.mxu0 %v423
    %594 = vmatprep.subr.bf16.mxu0 %v467
    %595 = vmatpush1.bf16.msra.mxu0 %v464
    %596 = vmatprep.subr.bf16.mxu0 0
    %597 = vmatpush1.bf16.msra.mxu0 0
    %598 = vmatprep.subr.bf16.mxu0 0
    %599 = vmatpush1.bf16.msra.mxu0 0
    %600 = vmatprep.subr.bf16.mxu0 0
    %601 = vmatpush1.bf16.msra.mxu0 0
    %602 = vmatprep.subr.bf16.mxu0 0
    %603 = vmatpush1.bf16.msra.mxu0 0
    %604 = vmatprep.subr.bf16.mxu0 0
    %605 = vmatpush1.bf16.msra.mxu0 0
    %606 = vmatprep.subr.bf16.mxu0 0
    %607 = vmatpush1.bf16.msra.mxu0 0
    %608 = vmatprep.subr.bf16.mxu0 0
    %609 = vmatpush1.bf16.msra.mxu0 0
    %610 = vmatprep.subr.bf16.mxu0 0
    %611 = vmatpush1.bf16.msra.mxu0 0
    %612 = vmatprep.subr.bf16.mxu0 0
    %613 = vmatpush1.bf16.msra.mxu0 0
    %614 = vmatprep.subr.bf16.mxu0 0
    %615 = vmatpush1.bf16.msra.mxu0 0
    %616 = vmatprep.subr.bf16.mxu0 0
    %617 = vmatpush1.bf16.msra.mxu0 0
    %618 = vmatprep.subr.bf16.mxu0 0
    %619 = vmatpush1.bf16.msra.mxu0 0
    %620 = vmatprep.subr.bf16.mxu0 0
    %621 = vmatpush1.bf16.msra.mxu0 0
    %622 = vmatprep.subr.bf16.mxu0 0
    %623 = vmatpush1.bf16.msra.mxu0 0
    %624 = vmatprep.mubr.bf16.mxu0 0
    %625 = vmatmul.mubr.bf16.gmra.mrb[0].mxu0 %v442
    %v626 = vpop.f32.mrb[0].mxu0
    %v627 = vadd.f32 %v438, %v626
    %v628 = vpop.f32.mrb[0].mxu0
    %v629 = vadd.f32 %v438, %v628
    %v630 = vpop.f32.mrb[0].mxu0
    %v631 = vpop.f32.mrb[0].mxu0
    %632 = vdwg.mxu0
    %v633 = vmax.f32 %v504, 0.0
    %v634 = vmax.f32 %v506, 0.0
    %v635 = vmax.f32 %v545, 0.0
    %v636 = vmax.f32 %v547, 0.0
    %v637 = vmax.f32 %v586, 0.0
    %v638 = vmax.f32 %v588, 0.0
    %v639 = vmax.f32 %v627, 0.0
    %v640 = vmax.f32 %v629, 0.0
    %641 = vrot.lane.b32.xlu0 %v633, 1
    %v642 = vpop.permute.xlu0 %641
    %643 = vrot.lane.b32.xlu0 %v634, 1
    %v644 = vpop.permute.xlu0 %643
    %645 = vrot.lane.b32.xlu0 %v635, 1
    %v646 = vpop.permute.xlu0 %645
    %647 = vrot.lane.b32.xlu0 %v636, 1
    %v648 = vpop.permute.xlu0 %647
    %649 = vrot.lane.b32.xlu0 %v637, 1
    %v650 = vpop.permute.xlu0 %649
    %651 = vrot.lane.b32.xlu0 %v638, 1
    %v652 = vpop.permute.xlu0 %651
    %653 = vrot.lane.b32.xlu0 %v639, 1
    %v654 = vpop.permute.xlu0 %653
    %655 = vrot.lane.b32.xlu0 %v640, 1
    %v656 = vpop.permute.xlu0 %655
    %vm657 = vcmp.lt.s32.totalorder %v47, 1
    %v658 = vsel %vm657, %v654, %v656
    %v659 = vsel %vm657, %v652, %v654
    %v660 = vsel %vm657, %v650, %v652
    %v661 = vsel %vm657, %v648, %v650
    %v662 = vsel %vm657, %v646, %v648
    %v663 = vsel %vm657, %v644, %v646
    %v664 = vsel %vm657, %v642, %v644
    %v665 = vsel %vm657, %v656, %v642
    %v666 = vsel %vm263, 1, 0
    %v667 = vsel %vm264, 1, 0
    %v668 = vsel %vm265, 1, 0
    %v669 = vsel %vm266, 1, 0
    %v670 = vsel %vm267, 1, 0
    %v671 = vsel %vm268, 1, 0
    %v672 = vsel %vm269, 1, 0
    %v673 = vsel %vm270, 1, 0
    %vm674 = vcmp.eq.s32.totalorder %v666, 1
    %vm675 = vcmp.eq.s32.totalorder %v667, 1
    %vm676 = vcmp.eq.s32.totalorder %v668, 1
    %vm677 = vcmp.eq.s32.totalorder %v669, 1
    %vm678 = vcmp.eq.s32.totalorder %v670, 1
    %vm679 = vcmp.eq.s32.totalorder %v671, 1
    %vm680 = vcmp.eq.s32.totalorder %v672, 1
    %vm681 = vcmp.eq.s32.totalorder %v673, 1
    %v682 = vsel %vm674, %v665, 0.0
    %v683 = vsel %vm675, %v664, 0.0
    %v684 = vsel %vm676, %v663, 0.0
    %v685 = vsel %vm677, %v662, 0.0
    %v686 = vsel %vm678, %v661, 0.0
    %v687 = vsel %vm679, %v660, 0.0
    %v688 = vsel %vm680, %v659, 0.0
    %v689 = vsel %vm681, %v658, 0.0
    %690 = vrot.lane.b32.xlu0 %v633, 127
    %v691 = vpop.permute.xlu0 %690
    %692 = vrot.lane.b32.xlu0 %v634, 127
    %v693 = vpop.permute.xlu0 %692
    %694 = vrot.lane.b32.xlu0 %v635, 127
    %v695 = vpop.permute.xlu0 %694
    %696 = vrot.lane.b32.xlu0 %v636, 127
    %v697 = vpop.permute.xlu0 %696
    %698 = vrot.lane.b32.xlu0 %v637, 127
    %v699 = vpop.permute.xlu0 %698
    %700 = vrot.lane.b32.xlu0 %v638, 127
    %v701 = vpop.permute.xlu0 %700
    %702 = vrot.lane.b32.xlu0 %v639, 127
    %v703 = vpop.permute.xlu0 %702
    %704 = vrot.lane.b32.xlu0 %v640, 127
    %v705 = vpop.permute.xlu0 %704
    %vm706 = vcmp.lt.s32.totalorder %v47, 127
    %v707 = vsel %vm706, %v703, %v705
    %v708 = vsel %vm706, %v701, %v703
    %v709 = vsel %vm706, %v699, %v701
    %v710 = vsel %vm706, %v697, %v699
    %v711 = vsel %vm706, %v695, %v697
    %v712 = vsel %vm706, %v693, %v695
    %v713 = vsel %vm706, %v691, %v693
    %v714 = vsel %vm706, %v705, %v691
    %v715 = vsel %vm271, 1, 0
    %v716 = vsel %vm272, 1, 0
    %v717 = vsel %vm273, 1, 0
    %v718 = vsel %vm274, 1, 0
    %v719 = vsel %vm275, 1, 0
    %v720 = vsel %vm276, 1, 0
    %v721 = vsel %vm277, 1, 0
    %v722 = vsel %vm278, 1, 0
    %vm723 = vcmp.eq.s32.totalorder %v715, 1
    %vm724 = vcmp.eq.s32.totalorder %v716, 1
    %vm725 = vcmp.eq.s32.totalorder %v717, 1
    %vm726 = vcmp.eq.s32.totalorder %v718, 1
    %vm727 = vcmp.eq.s32.totalorder %v719, 1
    %vm728 = vcmp.eq.s32.totalorder %v720, 1
    %vm729 = vcmp.eq.s32.totalorder %v721, 1
    %vm730 = vcmp.eq.s32.totalorder %v722, 1
    %v731 = vsel %vm723, %v713, 0.0
    %v732 = vsel %vm724, %v712, 0.0
    %v733 = vsel %vm725, %v711, 0.0
    %v734 = vsel %vm726, %v710, 0.0
    %v735 = vsel %vm727, %v709, 0.0
    %v736 = vsel %vm728, %v708, 0.0
    %v737 = vsel %vm729, %v707, 0.0
    %v738 = vsel %vm730, %v714, 0.0
    %v739 = vpack.c.bf16 %v633, %v682
    %v740 = vpack.c.bf16 %v634, %v683
    %v741 = vpack.c.bf16 %v635, %v684
    %v742 = vpack.c.bf16 %v636, %v685
    %v743 = vpack.c.bf16 %v637, %v686
    %v744 = vpack.c.bf16 %v638, %v687
    %v745 = vpack.c.bf16 %v639, %v688
    %v746 = vpack.c.bf16 %v640, %v689
    %v747 = vpack.c.bf16 %v731, %v731
    %v748 = vpack.c.bf16 %v732, %v732
    %v749 = vpack.c.bf16 %v733, %v733
    %v750 = vpack.c.bf16 %v734, %v734
    %v751 = vpack.c.bf16 %v735, %v735
    %v752 = vpack.c.bf16 %v736, %v736
    %v753 = vpack.c.bf16 %v737, %v737
    %v754 = vpack.c.bf16 %v738, %v738
    %v755 = vld [vmem:[%s3] sm:$0xf]
    %v756 = vld [vmem:[%s4] sm:$0xff]
    %758 = vset.pattern.permute.xlu0 0
    %759 = vperm.xlu0 %758, %v756
    %v760 = vpop.permute.xlu0 %759
    %v763 = vsel %vm440, %v755, 0
    %v766 = vsel %vm444, %v747, 0
    %v769 = vsel %vm444, %v748, 0
    %v772 = vsel %vm444, %v749, 0
    %v775 = vsel %vm444, %v750, 0
    %v778 = vsel %vm444, %v751, 0
    %v781 = vsel %vm444, %v752, 0
    %v784 = vsel %vm444, %v753, 0
    %v787 = vsel %vm444, %v754, 0
    %789 = vmatprep.subr.bf16.mxu0 %v740
    %790 = vmatpush1.bf16.msra.mxu0 %v739
    %791 = vmatprep.subr.bf16.mxu0 %v769
    %792 = vmatpush1.bf16.msra.mxu0 %v766
    %793 = vmatprep.subr.bf16.mxu0 0
    %794 = vmatpush1.bf16.msra.mxu0 0
    %795 = vmatprep.subr.bf16.mxu0 0
    %796 = vmatpush1.bf16.msra.mxu0 0
    %797 = vmatprep.subr.bf16.mxu0 0
    %798 = vmatpush1.bf16.msra.mxu0 0
    %799 = vmatprep.subr.bf16.mxu0 0
    %800 = vmatpush1.bf16.msra.mxu0 0
    %801 = vmatprep.subr.bf16.mxu0 0
    %802 = vmatpush1.bf16.msra.mxu0 0
    %803 = vmatprep.subr.bf16.mxu0 0
    %804 = vmatpush1.bf16.msra.mxu0 0
    %805 = vmatprep.subr.bf16.mxu0 0
    %806 = vmatpush1.bf16.msra.mxu0 0
    %807 = vmatprep.subr.bf16.mxu0 0
    %808 = vmatpush1.bf16.msra.mxu0 0
    %809 = vmatprep.subr.bf16.mxu0 0
    %810 = vmatpush1.bf16.msra.mxu0 0
    %811 = vmatprep.subr.bf16.mxu0 0
    %812 = vmatpush1.bf16.msra.mxu0 0
    %813 = vmatprep.subr.bf16.mxu0 0
    %814 = vmatpush1.bf16.msra.mxu0 0
    %815 = vmatprep.subr.bf16.mxu0 0
    %816 = vmatpush1.bf16.msra.mxu0 0
    %817 = vmatprep.subr.bf16.mxu0 0
    %818 = vmatpush1.bf16.msra.mxu0 0
    %819 = vmatprep.subr.bf16.mxu0 0
    %820 = vmatpush1.bf16.msra.mxu0 0
    %821 = vmatprep.mubr.bf16.mxu0 0
    %822 = vmatmul.mubr.bf16.gmra.mrb[0].mxu0 %v763
    %v823 = vpop.f32.mrb[0].mxu0
    %v824 = vadd.f32 %v760, %v823
    %v825 = vpop.f32.mrb[0].mxu0
    %v826 = vadd.f32 %v760, %v825
    %v827 = vpop.f32.mrb[0].mxu0
    %v828 = vpop.f32.mrb[0].mxu0
    %829 = vdwg.mxu0
    %830 = vmatprep.subr.bf16.mxu0 %v742
    %831 = vmatpush1.bf16.msra.mxu0 %v741
    %832 = vmatprep.subr.bf16.mxu0 %v775
    %833 = vmatpush1.bf16.msra.mxu0 %v772
    %834 = vmatprep.subr.bf16.mxu0 0
    %835 = vmatpush1.bf16.msra.mxu0 0
    %836 = vmatprep.subr.bf16.mxu0 0
    %837 = vmatpush1.bf16.msra.mxu0 0
    %838 = vmatprep.subr.bf16.mxu0 0
    %839 = vmatpush1.bf16.msra.mxu0 0
    %840 = vmatprep.subr.bf16.mxu0 0
    %841 = vmatpush1.bf16.msra.mxu0 0
    %842 = vmatprep.subr.bf16.mxu0 0
    %843 = vmatpush1.bf16.msra.mxu0 0
    %844 = vmatprep.subr.bf16.mxu0 0
    %845 = vmatpush1.bf16.msra.mxu0 0
    %846 = vmatprep.subr.bf16.mxu0 0
    %847 = vmatpush1.bf16.msra.mxu0 0
    %848 = vmatprep.subr.bf16.mxu0 0
    %849 = vmatpush1.bf16.msra.mxu0 0
    %850 = vmatprep.subr.bf16.mxu0 0
    %851 = vmatpush1.bf16.msra.mxu0 0
    %852 = vmatprep.subr.bf16.mxu0 0
    %853 = vmatpush1.bf16.msra.mxu0 0
    %854 = vmatprep.subr.bf16.mxu0 0
    %855 = vmatpush1.bf16.msra.mxu0 0
    %856 = vmatprep.subr.bf16.mxu0 0
    %857 = vmatpush1.bf16.msra.mxu0 0
    %858 = vmatprep.subr.bf16.mxu0 0
    %859 = vmatpush1.bf16.msra.mxu0 0
    %860 = vmatprep.subr.bf16.mxu0 0
    %861 = vmatpush1.bf16.msra.mxu0 0
    %862 = vmatprep.mubr.bf16.mxu0 0
    %863 = vmatmul.mubr.bf16.gmra.mrb[0].mxu0 %v763
    %v864 = vpop.f32.mrb[0].mxu0
    %v865 = vadd.f32 %v760, %v864
    %v866 = vpop.f32.mrb[0].mxu0
    %v867 = vadd.f32 %v760, %v866
    %v868 = vpop.f32.mrb[0].mxu0
    %v869 = vpop.f32.mrb[0].mxu0
    %870 = vdwg.mxu0
    %871 = vmatprep.subr.bf16.mxu0 %v744
    %872 = vmatpush1.bf16.msra.mxu0 %v743
    %873 = vmatprep.subr.bf16.mxu0 %v781
    %874 = vmatpush1.bf16.msra.mxu0 %v778
    %875 = vmatprep.subr.bf16.mxu0 0
    %876 = vmatpush1.bf16.msra.mxu0 0
    %877 = vmatprep.subr.bf16.mxu0 0
    %878 = vmatpush1.bf16.msra.mxu0 0
    %879 = vmatprep.subr.bf16.mxu0 0
    %880 = vmatpush1.bf16.msra.mxu0 0
    %881 = vmatprep.subr.bf16.mxu0 0
    %882 = vmatpush1.bf16.msra.mxu0 0
    %883 = vmatprep.subr.bf16.mxu0 0
    %884 = vmatpush1.bf16.msra.mxu0 0
    %885 = vmatprep.subr.bf16.mxu0 0
    %886 = vmatpush1.bf16.msra.mxu0 0
    %887 = vmatprep.subr.bf16.mxu0 0
    %888 = vmatpush1.bf16.msra.mxu0 0
    %889 = vmatprep.subr.bf16.mxu0 0
    %890 = vmatpush1.bf16.msra.mxu0 0
    %891 = vmatprep.subr.bf16.mxu0 0
    %892 = vmatpush1.bf16.msra.mxu0 0
    %893 = vmatprep.subr.bf16.mxu0 0
    %894 = vmatpush1.bf16.msra.mxu0 0
    %895 = vmatprep.subr.bf16.mxu0 0
    %896 = vmatpush1.bf16.msra.mxu0 0
    %897 = vmatprep.subr.bf16.mxu0 0
    %898 = vmatpush1.bf16.msra.mxu0 0
    %899 = vmatprep.subr.bf16.mxu0 0
    %900 = vmatpush1.bf16.msra.mxu0 0
    %901 = vmatprep.subr.bf16.mxu0 0
    %902 = vmatpush1.bf16.msra.mxu0 0
    %903 = vmatprep.mubr.bf16.mxu0 0
    %904 = vmatmul.mubr.bf16.gmra.mrb[0].mxu0 %v763
    %v905 = vpop.f32.mrb[0].mxu0
    %v906 = vadd.f32 %v760, %v905
    %v907 = vpop.f32.mrb[0].mxu0
    %v908 = vadd.f32 %v760, %v907
    %v909 = vpop.f32.mrb[0].mxu0
    %v910 = vpop.f32.mrb[0].mxu0
    %911 = vdwg.mxu0
    %912 = vmatprep.subr.bf16.mxu0 %v746
    %913 = vmatpush1.bf16.msra.mxu0 %v745
    %914 = vmatprep.subr.bf16.mxu0 %v787
    %915 = vmatpush1.bf16.msra.mxu0 %v784
    %916 = vmatprep.subr.bf16.mxu0 0
    %917 = vmatpush1.bf16.msra.mxu0 0
    %918 = vmatprep.subr.bf16.mxu0 0
    %919 = vmatpush1.bf16.msra.mxu0 0
    %920 = vmatprep.subr.bf16.mxu0 0
    %921 = vmatpush1.bf16.msra.mxu0 0
    %922 = vmatprep.subr.bf16.mxu0 0
    %923 = vmatpush1.bf16.msra.mxu0 0
    %924 = vmatprep.subr.bf16.mxu0 0
    %925 = vmatpush1.bf16.msra.mxu0 0
    %926 = vmatprep.subr.bf16.mxu0 0
    %927 = vmatpush1.bf16.msra.mxu0 0
    %928 = vmatprep.subr.bf16.mxu0 0
    %929 = vmatpush1.bf16.msra.mxu0 0
    %930 = vmatprep.subr.bf16.mxu0 0
    %931 = vmatpush1.bf16.msra.mxu0 0
    %932 = vmatprep.subr.bf16.mxu0 0
    %933 = vmatpush1.bf16.msra.mxu0 0
    %934 = vmatprep.subr.bf16.mxu0 0
    %935 = vmatpush1.bf16.msra.mxu0 0
    %936 = vmatprep.subr.bf16.mxu0 0
    %937 = vmatpush1.bf16.msra.mxu0 0
    %938 = vmatprep.subr.bf16.mxu0 0
    %939 = vmatpush1.bf16.msra.mxu0 0
    %940 = vmatprep.subr.bf16.mxu0 0
    %941 = vmatpush1.bf16.msra.mxu0 0
    %942 = vmatprep.subr.bf16.mxu0 0
    %943 = vmatpush1.bf16.msra.mxu0 0
    %944 = vmatprep.mubr.bf16.mxu0 0
    %945 = vmatmul.mubr.bf16.gmra.mrb[0].mxu0 %v763
    %v946 = vpop.f32.mrb[0].mxu0
    %v947 = vadd.f32 %v760, %v946
    %v948 = vpop.f32.mrb[0].mxu0
    %v949 = vadd.f32 %v760, %v948
    %v950 = vpop.f32.mrb[0].mxu0
    %v951 = vpop.f32.mrb[0].mxu0
    %952 = vdwg.mxu0
    %v953 = vmax.f32 %v824, 0.0
    %v954 = vmax.f32 %v826, 0.0
    %v955 = vmax.f32 %v865, 0.0
    %v956 = vmax.f32 %v867, 0.0
    %v957 = vmax.f32 %v906, 0.0
    %v958 = vmax.f32 %v908, 0.0
    %v959 = vmax.f32 %v947, 0.0
    %v960 = vmax.f32 %v949, 0.0
    %961 = vrot.lane.b32.xlu0 %v953, 64
    %v962 = vpop.permute.xlu0 %961
    %963 = vrot.lane.b32.xlu0 %v954, 64
    %v964 = vpop.permute.xlu0 %963
    %965 = vrot.lane.b32.xlu0 %v955, 64
    %v966 = vpop.permute.xlu0 %965
    %967 = vrot.lane.b32.xlu0 %v956, 64
    %v968 = vpop.permute.xlu0 %967
    %969 = vrot.lane.b32.xlu0 %v957, 64
    %v970 = vpop.permute.xlu0 %969
    %971 = vrot.lane.b32.xlu0 %v958, 64
    %v972 = vpop.permute.xlu0 %971
    %973 = vrot.lane.b32.xlu0 %v959, 64
    %v974 = vpop.permute.xlu0 %973
    %975 = vrot.lane.b32.xlu0 %v960, 64
    %v976 = vpop.permute.xlu0 %975
    %vm977 = vcmp.lt.s32.totalorder %v47, 64
    %v978 = vsel %vm977, %v974, %v976
    %v979 = vsel %vm977, %v972, %v974
    %v980 = vsel %vm977, %v970, %v972
    %v981 = vsel %vm977, %v968, %v970
    %v982 = vsel %vm977, %v966, %v968
    %v983 = vsel %vm977, %v964, %v966
    %v984 = vsel %vm977, %v962, %v964
    %v985 = vsel %vm977, %v976, %v962
    %v986 = vsel %vm279, 1, 0
    %v987 = vsel %vm280, 1, 0
    %v988 = vsel %vm281, 1, 0
    %v989 = vsel %vm282, 1, 0
    %v990 = vsel %vm283, 1, 0
    %v991 = vsel %vm284, 1, 0
    %v992 = vsel %vm285, 1, 0
    %v993 = vsel %vm286, 1, 0
    %vm994 = vcmp.eq.s32.totalorder %v986, 1
    %vm995 = vcmp.eq.s32.totalorder %v987, 1
    %vm996 = vcmp.eq.s32.totalorder %v988, 1
    %vm997 = vcmp.eq.s32.totalorder %v989, 1
    %vm998 = vcmp.eq.s32.totalorder %v990, 1
    %vm999 = vcmp.eq.s32.totalorder %v991, 1
    %vm1000 = vcmp.eq.s32.totalorder %v992, 1
    %vm1001 = vcmp.eq.s32.totalorder %v993, 1
    %v1002 = vsel %vm994, %v985, 0.0
    %v1003 = vsel %vm995, %v984, 0.0
    %v1004 = vsel %vm996, %v983, 0.0
    %v1005 = vsel %vm997, %v982, 0.0
    %v1006 = vsel %vm998, %v981, 0.0
    %v1007 = vsel %vm999, %v980, 0.0
    %v1008 = vsel %vm1000, %v979, 0.0
    %v1009 = vsel %vm1001, %v978, 0.0
    %v1010 = vsel %vm287, 1, 0
    %v1011 = vsel %vm288, 1, 0
    %v1012 = vsel %vm289, 1, 0
    %v1013 = vsel %vm290, 1, 0
    %v1014 = vsel %vm291, 1, 0
    %v1015 = vsel %vm292, 1, 0
    %v1016 = vsel %vm293, 1, 0
    %v1017 = vsel %vm294, 1, 0
    %vm1018 = vcmp.eq.s32.totalorder %v1010, 1
    %vm1019 = vcmp.eq.s32.totalorder %v1011, 1
    %vm1020 = vcmp.eq.s32.totalorder %v1012, 1
    %vm1021 = vcmp.eq.s32.totalorder %v1013, 1
    %vm1022 = vcmp.eq.s32.totalorder %v1014, 1
    %vm1023 = vcmp.eq.s32.totalorder %v1015, 1
    %vm1024 = vcmp.eq.s32.totalorder %v1016, 1
    %vm1025 = vcmp.eq.s32.totalorder %v1017, 1
    %v1026 = vsel %vm1018, %v984, 0.0
    %v1027 = vsel %vm1019, %v983, 0.0
    %v1028 = vsel %vm1020, %v982, 0.0
    %v1029 = vsel %vm1021, %v981, 0.0
    %v1030 = vsel %vm1022, %v980, 0.0
    %v1031 = vsel %vm1023, %v979, 0.0
    %v1032 = vsel %vm1024, %v978, 0.0
    %v1033 = vsel %vm1025, %v985, 0.0
    %v1034 = vpack.c.bf16 %v953, %v1002
    %v1035 = vpack.c.bf16 %v954, %v1003
    %v1036 = vpack.c.bf16 %v955, %v1004
    %v1037 = vpack.c.bf16 %v956, %v1005
    %v1038 = vpack.c.bf16 %v957, %v1006
    %v1039 = vpack.c.bf16 %v958, %v1007
    %v1040 = vpack.c.bf16 %v959, %v1008
    %v1041 = vpack.c.bf16 %v960, %v1009
    %v1042 = vpack.c.bf16 %v1026, %v1026
    %v1043 = vpack.c.bf16 %v1027, %v1027
    %v1044 = vpack.c.bf16 %v1028, %v1028
    %v1045 = vpack.c.bf16 %v1029, %v1029
    %v1046 = vpack.c.bf16 %v1030, %v1030
    %v1047 = vpack.c.bf16 %v1031, %v1031
    %v1048 = vpack.c.bf16 %v1032, %v1032
    %v1049 = vpack.c.bf16 %v1033, %v1033
    %v1050 = vld [vmem:[%s5] sm:$0xf]
    %v1051 = vld [vmem:[%s6] sm:$0xff]
    %1053 = vset.pattern.permute.xlu0 0
    %1054 = vperm.xlu0 %1053, %v1051
    %v1055 = vpop.permute.xlu0 %1054
    %v1058 = vsel %vm440, %v1050, 0
    %v1061 = vsel %vm444, %v1042, 0
    %v1064 = vsel %vm444, %v1043, 0
    %v1067 = vsel %vm444, %v1044, 0
    %v1070 = vsel %vm444, %v1045, 0
    %v1073 = vsel %vm444, %v1046, 0
    %v1076 = vsel %vm444, %v1047, 0
    %v1079 = vsel %vm444, %v1048, 0
    %v1082 = vsel %vm444, %v1049, 0
    %1084 = vmatprep.subr.bf16.mxu0 %v1035
    %1085 = vmatpush1.bf16.msra.mxu0 %v1034
    %1086 = vmatprep.subr.bf16.mxu0 %v1064
    %1087 = vmatpush1.bf16.msra.mxu0 %v1061
    %1088 = vmatprep.subr.bf16.mxu0 0
    %1089 = vmatpush1.bf16.msra.mxu0 0
    %1090 = vmatprep.subr.bf16.mxu0 0
    %1091 = vmatpush1.bf16.msra.mxu0 0
    %1092 = vmatprep.subr.bf16.mxu0 0
    %1093 = vmatpush1.bf16.msra.mxu0 0
    %1094 = vmatprep.subr.bf16.mxu0 0
    %1095 = vmatpush1.bf16.msra.mxu0 0
    %1096 = vmatprep.subr.bf16.mxu0 0
    %1097 = vmatpush1.bf16.msra.mxu0 0
    %1098 = vmatprep.subr.bf16.mxu0 0
    %1099 = vmatpush1.bf16.msra.mxu0 0
    %1100 = vmatprep.subr.bf16.mxu0 0
    %1101 = vmatpush1.bf16.msra.mxu0 0
    %1102 = vmatprep.subr.bf16.mxu0 0
    %1103 = vmatpush1.bf16.msra.mxu0 0
    %1104 = vmatprep.subr.bf16.mxu0 0
    %1105 = vmatpush1.bf16.msra.mxu0 0
    %1106 = vmatprep.subr.bf16.mxu0 0
    %1107 = vmatpush1.bf16.msra.mxu0 0
    %1108 = vmatprep.subr.bf16.mxu0 0
    %1109 = vmatpush1.bf16.msra.mxu0 0
    %1110 = vmatprep.subr.bf16.mxu0 0
    %1111 = vmatpush1.bf16.msra.mxu0 0
    %1112 = vmatprep.subr.bf16.mxu0 0
    %1113 = vmatpush1.bf16.msra.mxu0 0
    %1114 = vmatprep.subr.bf16.mxu0 0
    %1115 = vmatpush1.bf16.msra.mxu0 0
    %1116 = vmatprep.mubr.bf16.mxu0 0
    %1117 = vmatmul.mubr.bf16.gmra.mrb[0].mxu0 %v1058
    %v1118 = vpop.f32.mrb[0].mxu0
    %v1119 = vadd.f32 %v1055, %v1118
    %v1120 = vpop.f32.mrb[0].mxu0
    %v1121 = vadd.f32 %v1055, %v1120
    %v1122 = vpop.f32.mrb[0].mxu0
    %v1123 = vpop.f32.mrb[0].mxu0
    %1124 = vdwg.mxu0
    %1125 = vmatprep.subr.bf16.mxu0 %v1037
    %1126 = vmatpush1.bf16.msra.mxu0 %v1036
    %1127 = vmatprep.subr.bf16.mxu0 %v1070
    %1128 = vmatpush1.bf16.msra.mxu0 %v1067
    %1129 = vmatprep.subr.bf16.mxu0 0
    %1130 = vmatpush1.bf16.msra.mxu0 0
    %1131 = vmatprep.subr.bf16.mxu0 0
    %1132 = vmatpush1.bf16.msra.mxu0 0
    %1133 = vmatprep.subr.bf16.mxu0 0
    %1134 = vmatpush1.bf16.msra.mxu0 0
    %1135 = vmatprep.subr.bf16.mxu0 0
    %1136 = vmatpush1.bf16.msra.mxu0 0
    %1137 = vmatprep.subr.bf16.mxu0 0
    %1138 = vmatpush1.bf16.msra.mxu0 0
    %1139 = vmatprep.subr.bf16.mxu0 0
    %1140 = vmatpush1.bf16.msra.mxu0 0
    %1141 = vmatprep.subr.bf16.mxu0 0
    %1142 = vmatpush1.bf16.msra.mxu0 0
    %1143 = vmatprep.subr.bf16.mxu0 0
    %1144 = vmatpush1.bf16.msra.mxu0 0
    %1145 = vmatprep.subr.bf16.mxu0 0
    %1146 = vmatpush1.bf16.msra.mxu0 0
    %1147 = vmatprep.subr.bf16.mxu0 0
    %1148 = vmatpush1.bf16.msra.mxu0 0
    %1149 = vmatprep.subr.bf16.mxu0 0
    %1150 = vmatpush1.bf16.msra.mxu0 0
    %1151 = vmatprep.subr.bf16.mxu0 0
    %1152 = vmatpush1.bf16.msra.mxu0 0
    %1153 = vmatprep.subr.bf16.mxu0 0
    %1154 = vmatpush1.bf16.msra.mxu0 0
    %1155 = vmatprep.subr.bf16.mxu0 0
    %1156 = vmatpush1.bf16.msra.mxu0 0
    %1157 = vmatprep.mubr.bf16.mxu0 0
    %1158 = vmatmul.mubr.bf16.gmra.mrb[0].mxu0 %v1058
    %v1159 = vpop.f32.mrb[0].mxu0
    %v1160 = vadd.f32 %v1055, %v1159
    %v1161 = vpop.f32.mrb[0].mxu0
    %v1162 = vadd.f32 %v1055, %v1161
    %v1163 = vpop.f32.mrb[0].mxu0
    %v1164 = vpop.f32.mrb[0].mxu0
    %1165 = vdwg.mxu0
    %1166 = vmatprep.subr.bf16.mxu0 %v1039
    %1167 = vmatpush1.bf16.msra.mxu0 %v1038
    %1168 = vmatprep.subr.bf16.mxu0 %v1076
    %1169 = vmatpush1.bf16.msra.mxu0 %v1073
    %1170 = vmatprep.subr.bf16.mxu0 0
    %1171 = vmatpush1.bf16.msra.mxu0 0
    %1172 = vmatprep.subr.bf16.mxu0 0
    %1173 = vmatpush1.bf16.msra.mxu0 0
    %1174 = vmatprep.subr.bf16.mxu0 0
    %1175 = vmatpush1.bf16.msra.mxu0 0
    %1176 = vmatprep.subr.bf16.mxu0 0
    %1177 = vmatpush1.bf16.msra.mxu0 0
    %1178 = vmatprep.subr.bf16.mxu0 0
    %1179 = vmatpush1.bf16.msra.mxu0 0
    %1180 = vmatprep.subr.bf16.mxu0 0
    %1181 = vmatpush1.bf16.msra.mxu0 0
    %1182 = vmatprep.subr.bf16.mxu0 0
    %1183 = vmatpush1.bf16.msra.mxu0 0
    %1184 = vmatprep.subr.bf16.mxu0 0
    %1185 = vmatpush1.bf16.msra.mxu0 0
    %1186 = vmatprep.subr.bf16.mxu0 0
    %1187 = vmatpush1.bf16.msra.mxu0 0
    %1188 = vmatprep.subr.bf16.mxu0 0
    %1189 = vmatpush1.bf16.msra.mxu0 0
    %1190 = vmatprep.subr.bf16.mxu0 0
    %1191 = vmatpush1.bf16.msra.mxu0 0
    %1192 = vmatprep.subr.bf16.mxu0 0
    %1193 = vmatpush1.bf16.msra.mxu0 0
    %1194 = vmatprep.subr.bf16.mxu0 0
    %1195 = vmatpush1.bf16.msra.mxu0 0
    %1196 = vmatprep.subr.bf16.mxu0 0
    %1197 = vmatpush1.bf16.msra.mxu0 0
    %1198 = vmatprep.mubr.bf16.mxu0 0
    %1199 = vmatmul.mubr.bf16.gmra.mrb[0].mxu0 %v1058
    %v1200 = vpop.f32.mrb[0].mxu0
    %v1201 = vadd.f32 %v1055, %v1200
    %v1202 = vpop.f32.mrb[0].mxu0
    %v1203 = vadd.f32 %v1055, %v1202
    %v1204 = vpop.f32.mrb[0].mxu0
    %v1205 = vpop.f32.mrb[0].mxu0
    %1206 = vdwg.mxu0
    %1207 = vmatprep.subr.bf16.mxu0 %v1041
    %1208 = vmatpush1.bf16.msra.mxu0 %v1040
    %1209 = vmatprep.subr.bf16.mxu0 %v1082
    %1210 = vmatpush1.bf16.msra.mxu0 %v1079
    %1211 = vmatprep.subr.bf16.mxu0 0
    %1212 = vmatpush1.bf16.msra.mxu0 0
    %1213 = vmatprep.subr.bf16.mxu0 0
    %1214 = vmatpush1.bf16.msra.mxu0 0
    %1215 = vmatprep.subr.bf16.mxu0 0
    %1216 = vmatpush1.bf16.msra.mxu0 0
    %1217 = vmatprep.subr.bf16.mxu0 0
    %1218 = vmatpush1.bf16.msra.mxu0 0
    %1219 = vmatprep.subr.bf16.mxu0 0
    %1220 = vmatpush1.bf16.msra.mxu0 0
    %1221 = vmatprep.subr.bf16.mxu0 0
    %1222 = vmatpush1.bf16.msra.mxu0 0
    %1223 = vmatprep.subr.bf16.mxu0 0
    %1224 = vmatpush1.bf16.msra.mxu0 0
    %1225 = vmatprep.subr.bf16.mxu0 0
    %1226 = vmatpush1.bf16.msra.mxu0 0
    %1227 = vmatprep.subr.bf16.mxu0 0
    %1228 = vmatpush1.bf16.msra.mxu0 0
    %1229 = vmatprep.subr.bf16.mxu0 0
    %1230 = vmatpush1.bf16.msra.mxu0 0
    %1231 = vmatprep.subr.bf16.mxu0 0
    %1232 = vmatpush1.bf16.msra.mxu0 0
    %1233 = vmatprep.subr.bf16.mxu0 0
    %1234 = vmatpush1.bf16.msra.mxu0 0
    %1235 = vmatprep.subr.bf16.mxu0 0
    %1236 = vmatpush1.bf16.msra.mxu0 0
    %1237 = vmatprep.subr.bf16.mxu0 0
    %1238 = vmatpush1.bf16.msra.mxu0 0
    %1239 = vmatprep.mubr.bf16.mxu0 0
    %1240 = vmatmul.mubr.bf16.gmra.mrb[0].mxu0 %v1058
    %v1241 = vpop.f32.mrb[0].mxu0
    %v1242 = vadd.f32 %v1055, %v1241
    %v1243 = vpop.f32.mrb[0].mxu0
    %v1244 = vadd.f32 %v1055, %v1243
    %v1245 = vpop.f32.mrb[0].mxu0
    %v1246 = vpop.f32.mrb[0].mxu0
    %1247 = vdwg.mxu0
    %v1248 = vmax.f32 %v1119, 0.0
    %v1249 = vmax.f32 %v1121, 0.0
    %v1250 = vmax.f32 %v1160, 0.0
    %v1251 = vmax.f32 %v1162, 0.0
    %v1252 = vmax.f32 %v1201, 0.0
    %v1253 = vmax.f32 %v1203, 0.0
    %v1254 = vmax.f32 %v1242, 0.0
    %v1255 = vmax.f32 %v1244, 0.0
    %1256 = vrot.lane.b32.xlu0 %v1248, 2
    %v1257 = vpop.permute.xlu0 %1256
    %1258 = vrot.lane.b32.xlu0 %v1249, 2
    %v1259 = vpop.permute.xlu0 %1258
    %1260 = vrot.lane.b32.xlu0 %v1250, 2
    %v1261 = vpop.permute.xlu0 %1260
    %1262 = vrot.lane.b32.xlu0 %v1251, 2
    %v1263 = vpop.permute.xlu0 %1262
    %1264 = vrot.lane.b32.xlu0 %v1252, 2
    %v1265 = vpop.permute.xlu0 %1264
    %1266 = vrot.lane.b32.xlu0 %v1253, 2
    %v1267 = vpop.permute.xlu0 %1266
    %1268 = vrot.lane.b32.xlu0 %v1254, 2
    %v1269 = vpop.permute.xlu0 %1268
    %1270 = vrot.lane.b32.xlu0 %v1255, 2
    %v1271 = vpop.permute.xlu0 %1270
    %vm1272 = vcmp.lt.s32.totalorder %v47, 2
    %v1273 = vsel %vm1272, %v1269, %v1271
    %v1274 = vsel %vm1272, %v1267, %v1269
    %v1275 = vsel %vm1272, %v1265, %v1267
    %v1276 = vsel %vm1272, %v1263, %v1265
    %v1277 = vsel %vm1272, %v1261, %v1263
    %v1278 = vsel %vm1272, %v1259, %v1261
    %v1279 = vsel %vm1272, %v1257, %v1259
    %v1280 = vsel %vm1272, %v1271, %v1257
    %v1281 = vsel %vm295, 1, 0
    %v1282 = vsel %vm296, 1, 0
    %v1283 = vsel %vm297, 1, 0
    %v1284 = vsel %vm298, 1, 0
    %v1285 = vsel %vm299, 1, 0
    %v1286 = vsel %vm300, 1, 0
    %v1287 = vsel %vm301, 1, 0
    %v1288 = vsel %vm302, 1, 0
    %vm1289 = vcmp.eq.s32.totalorder %v1281, 1
    %vm1290 = vcmp.eq.s32.totalorder %v1282, 1
    %vm1291 = vcmp.eq.s32.totalorder %v1283, 1
    %vm1292 = vcmp.eq.s32.totalorder %v1284, 1
    %vm1293 = vcmp.eq.s32.totalorder %v1285, 1
    %vm1294 = vcmp.eq.s32.totalorder %v1286, 1
    %vm1295 = vcmp.eq.s32.totalorder %v1287, 1
    %vm1296 = vcmp.eq.s32.totalorder %v1288, 1
    %v1297 = vsel %vm1289, %v1280, 0.0
    %v1298 = vsel %vm1290, %v1279, 0.0
    %v1299 = vsel %vm1291, %v1278, 0.0
    %v1300 = vsel %vm1292, %v1277, 0.0
    %v1301 = vsel %vm1293, %v1276, 0.0
    %v1302 = vsel %vm1294, %v1275, 0.0
    %v1303 = vsel %vm1295, %v1274, 0.0
    %v1304 = vsel %vm1296, %v1273, 0.0
    %1305 = vrot.lane.b32.xlu0 %v1248, 126
    %v1306 = vpop.permute.xlu0 %1305
    %1307 = vrot.lane.b32.xlu0 %v1249, 126
    %v1308 = vpop.permute.xlu0 %1307
    %1309 = vrot.lane.b32.xlu0 %v1250, 126
    %v1310 = vpop.permute.xlu0 %1309
    %1311 = vrot.lane.b32.xlu0 %v1251, 126
    %v1312 = vpop.permute.xlu0 %1311
    %1313 = vrot.lane.b32.xlu0 %v1252, 126
    %v1314 = vpop.permute.xlu0 %1313
    %1315 = vrot.lane.b32.xlu0 %v1253, 126
    %v1316 = vpop.permute.xlu0 %1315
    %1317 = vrot.lane.b32.xlu0 %v1254, 126
    %v1318 = vpop.permute.xlu0 %1317
    %1319 = vrot.lane.b32.xlu0 %v1255, 126
    %v1320 = vpop.permute.xlu0 %1319
    %vm1321 = vcmp.lt.s32.totalorder %v47, 126
    %v1322 = vsel %vm1321, %v1318, %v1320
    %v1323 = vsel %vm1321, %v1316, %v1318
    %v1324 = vsel %vm1321, %v1314, %v1316
    %v1325 = vsel %vm1321, %v1312, %v1314
    %v1326 = vsel %vm1321, %v1310, %v1312
    %v1327 = vsel %vm1321, %v1308, %v1310
    %v1328 = vsel %vm1321, %v1306, %v1308
    %v1329 = vsel %vm1321, %v1320, %v1306
    %v1330 = vsel %vm303, 1, 0
    %v1331 = vsel %vm304, 1, 0
    %v1332 = vsel %vm305, 1, 0
    %v1333 = vsel %vm306, 1, 0
    %v1334 = vsel %vm307, 1, 0
    %v1335 = vsel %vm308, 1, 0
    %v1336 = vsel %vm309, 1, 0
    %v1337 = vsel %vm310, 1, 0
    %vm1338 = vcmp.eq.s32.totalorder %v1330, 1
    %vm1339 = vcmp.eq.s32.totalorder %v1331, 1
    %vm1340 = vcmp.eq.s32.totalorder %v1332, 1
    %vm1341 = vcmp.eq.s32.totalorder %v1333, 1
    %vm1342 = vcmp.eq.s32.totalorder %v1334, 1
    %vm1343 = vcmp.eq.s32.totalorder %v1335, 1
    %vm1344 = vcmp.eq.s32.totalorder %v1336, 1
    %vm1345 = vcmp.eq.s32.totalorder %v1337, 1
    %v1346 = vsel %vm1338, %v1328, 0.0
    %v1347 = vsel %vm1339, %v1327, 0.0
    %v1348 = vsel %vm1340, %v1326, 0.0
    %v1349 = vsel %vm1341, %v1325, 0.0
    %v1350 = vsel %vm1342, %v1324, 0.0
    %v1351 = vsel %vm1343, %v1323, 0.0
    %v1352 = vsel %vm1344, %v1322, 0.0
    %v1353 = vsel %vm1345, %v1329, 0.0
    %v1354 = vpack.c.bf16 %v1248, %v1297
    %v1355 = vpack.c.bf16 %v1249, %v1298
    %v1356 = vpack.c.bf16 %v1250, %v1299
    %v1357 = vpack.c.bf16 %v1251, %v1300
    %v1358 = vpack.c.bf16 %v1252, %v1301
    %v1359 = vpack.c.bf16 %v1253, %v1302
    %v1360 = vpack.c.bf16 %v1254, %v1303
    %v1361 = vpack.c.bf16 %v1255, %v1304
    %v1362 = vpack.c.bf16 %v1346, %v1346
    %v1363 = vpack.c.bf16 %v1347, %v1347
    %v1364 = vpack.c.bf16 %v1348, %v1348
    %v1365 = vpack.c.bf16 %v1349, %v1349
    %v1366 = vpack.c.bf16 %v1350, %v1350
    %v1367 = vpack.c.bf16 %v1351, %v1351
    %v1368 = vpack.c.bf16 %v1352, %v1352
    %v1369 = vpack.c.bf16 %v1353, %v1353
    %v1370 = vld [vmem:[%s7] sm:$0xf]
    %v1371 = vld [vmem:[%s8] sm:$0xff]
    %1373 = vset.pattern.permute.xlu0 0
    %1374 = vperm.xlu0 %1373, %v1371
    %v1375 = vpop.permute.xlu0 %1374
    %v1378 = vsel %vm440, %v1370, 0
    %v1381 = vsel %vm444, %v1362, 0
    %v1384 = vsel %vm444, %v1363, 0
    %v1387 = vsel %vm444, %v1364, 0
    %v1390 = vsel %vm444, %v1365, 0
    %v1393 = vsel %vm444, %v1366, 0
    %v1396 = vsel %vm444, %v1367, 0
    %v1399 = vsel %vm444, %v1368, 0
    %v1402 = vsel %vm444, %v1369, 0
    %1404 = vmatprep.subr.bf16.mxu0 %v1355
    %1405 = vmatpush1.bf16.msra.mxu0 %v1354
    %1406 = vmatprep.subr.bf16.mxu0 %v1384
    %1407 = vmatpush1.bf16.msra.mxu0 %v1381
    %1408 = vmatprep.subr.bf16.mxu0 0
    %1409 = vmatpush1.bf16.msra.mxu0 0
    %1410 = vmatprep.subr.bf16.mxu0 0
    %1411 = vmatpush1.bf16.msra.mxu0 0
    %1412 = vmatprep.subr.bf16.mxu0 0
    %1413 = vmatpush1.bf16.msra.mxu0 0
    %1414 = vmatprep.subr.bf16.mxu0 0
    %1415 = vmatpush1.bf16.msra.mxu0 0
    %1416 = vmatprep.subr.bf16.mxu0 0
    %1417 = vmatpush1.bf16.msra.mxu0 0
    %1418 = vmatprep.subr.bf16.mxu0 0
    %1419 = vmatpush1.bf16.msra.mxu0 0
    %1420 = vmatprep.subr.bf16.mxu0 0
    %1421 = vmatpush1.bf16.msra.mxu0 0
    %1422 = vmatprep.subr.bf16.mxu0 0
    %1423 = vmatpush1.bf16.msra.mxu0 0
    %1424 = vmatprep.subr.bf16.mxu0 0
    %1425 = vmatpush1.bf16.msra.mxu0 0
    %1426 = vmatprep.subr.bf16.mxu0 0
    %1427 = vmatpush1.bf16.msra.mxu0 0
    %1428 = vmatprep.subr.bf16.mxu0 0
    %1429 = vmatpush1.bf16.msra.mxu0 0
    %1430 = vmatprep.subr.bf16.mxu0 0
    %1431 = vmatpush1.bf16.msra.mxu0 0
    %1432 = vmatprep.subr.bf16.mxu0 0
    %1433 = vmatpush1.bf16.msra.mxu0 0
    %1434 = vmatprep.subr.bf16.mxu0 0
    %1435 = vmatpush1.bf16.msra.mxu0 0
    %1436 = vmatprep.mubr.bf16.mxu0 0
    %1437 = vmatmul.mubr.bf16.gmra.mrb[0].mxu0 %v1378
    %v1438 = vpop.f32.mrb[0].mxu0
    %v1439 = vadd.f32 %v1375, %v1438
    %v1440 = vpop.f32.mrb[0].mxu0
    %v1441 = vadd.f32 %v1375, %v1440
    %v1442 = vpop.f32.mrb[0].mxu0
    %v1443 = vpop.f32.mrb[0].mxu0
    %1444 = vdwg.mxu0
    %1445 = vmatprep.subr.bf16.mxu0 %v1357
    %1446 = vmatpush1.bf16.msra.mxu0 %v1356
    %1447 = vmatprep.subr.bf16.mxu0 %v1390
    %1448 = vmatpush1.bf16.msra.mxu0 %v1387
    %1449 = vmatprep.subr.bf16.mxu0 0
    %1450 = vmatpush1.bf16.msra.mxu0 0
    %1451 = vmatprep.subr.bf16.mxu0 0
    %1452 = vmatpush1.bf16.msra.mxu0 0
    %1453 = vmatprep.subr.bf16.mxu0 0
    %1454 = vmatpush1.bf16.msra.mxu0 0
    %1455 = vmatprep.subr.bf16.mxu0 0
    %1456 = vmatpush1.bf16.msra.mxu0 0
    %1457 = vmatprep.subr.bf16.mxu0 0
    %1458 = vmatpush1.bf16.msra.mxu0 0
    %1459 = vmatprep.subr.bf16.mxu0 0
    %1460 = vmatpush1.bf16.msra.mxu0 0
    %1461 = vmatprep.subr.bf16.mxu0 0
    %1462 = vmatpush1.bf16.msra.mxu0 0
    %1463 = vmatprep.subr.bf16.mxu0 0
    %1464 = vmatpush1.bf16.msra.mxu0 0
    %1465 = vmatprep.subr.bf16.mxu0 0
    %1466 = vmatpush1.bf16.msra.mxu0 0
    %1467 = vmatprep.subr.bf16.mxu0 0
    %1468 = vmatpush1.bf16.msra.mxu0 0
    %1469 = vmatprep.subr.bf16.mxu0 0
    %1470 = vmatpush1.bf16.msra.mxu0 0
    %1471 = vmatprep.subr.bf16.mxu0 0
    %1472 = vmatpush1.bf16.msra.mxu0 0
    %1473 = vmatprep.subr.bf16.mxu0 0
    %1474 = vmatpush1.bf16.msra.mxu0 0
    %1475 = vmatprep.subr.bf16.mxu0 0
    %1476 = vmatpush1.bf16.msra.mxu0 0
    %1477 = vmatprep.mubr.bf16.mxu0 0
    %1478 = vmatmul.mubr.bf16.gmra.mrb[0].mxu0 %v1378
    %v1479 = vpop.f32.mrb[0].mxu0
    %v1480 = vadd.f32 %v1375, %v1479
    %v1481 = vpop.f32.mrb[0].mxu0
    %v1482 = vadd.f32 %v1375, %v1481
    %v1483 = vpop.f32.mrb[0].mxu0
    %v1484 = vpop.f32.mrb[0].mxu0
    %1485 = vdwg.mxu0
    %1486 = vmatprep.subr.bf16.mxu0 %v1359
    %1487 = vmatpush1.bf16.msra.mxu0 %v1358
    %1488 = vmatprep.subr.bf16.mxu0 %v1396
    %1489 = vmatpush1.bf16.msra.mxu0 %v1393
    %1490 = vmatprep.subr.bf16.mxu0 0
    %1491 = vmatpush1.bf16.msra.mxu0 0
    %1492 = vmatprep.subr.bf16.mxu0 0
    %1493 = vmatpush1.bf16.msra.mxu0 0
    %1494 = vmatprep.subr.bf16.mxu0 0
    %1495 = vmatpush1.bf16.msra.mxu0 0
    %1496 = vmatprep.subr.bf16.mxu0 0
    %1497 = vmatpush1.bf16.msra.mxu0 0
    %1498 = vmatprep.subr.bf16.mxu0 0
    %1499 = vmatpush1.bf16.msra.mxu0 0
    %1500 = vmatprep.subr.bf16.mxu0 0
    %1501 = vmatpush1.bf16.msra.mxu0 0
    %1502 = vmatprep.subr.bf16.mxu0 0
    %1503 = vmatpush1.bf16.msra.mxu0 0
    %1504 = vmatprep.subr.bf16.mxu0 0
    %1505 = vmatpush1.bf16.msra.mxu0 0
    %1506 = vmatprep.subr.bf16.mxu0 0
    %1507 = vmatpush1.bf16.msra.mxu0 0
    %1508 = vmatprep.subr.bf16.mxu0 0
    %1509 = vmatpush1.bf16.msra.mxu0 0
    %1510 = vmatprep.subr.bf16.mxu0 0
    %1511 = vmatpush1.bf16.msra.mxu0 0
    %1512 = vmatprep.subr.bf16.mxu0 0
    %1513 = vmatpush1.bf16.msra.mxu0 0
    %1514 = vmatprep.subr.bf16.mxu0 0
    %1515 = vmatpush1.bf16.msra.mxu0 0
    %1516 = vmatprep.subr.bf16.mxu0 0
    %1517 = vmatpush1.bf16.msra.mxu0 0
    %1518 = vmatprep.mubr.bf16.mxu0 0
    %1519 = vmatmul.mubr.bf16.gmra.mrb[0].mxu0 %v1378
    %v1520 = vpop.f32.mrb[0].mxu0
    %v1521 = vadd.f32 %v1375, %v1520
    %v1522 = vpop.f32.mrb[0].mxu0
    %v1523 = vadd.f32 %v1375, %v1522
    %v1524 = vpop.f32.mrb[0].mxu0
    %v1525 = vpop.f32.mrb[0].mxu0
    %1526 = vdwg.mxu0
    %1527 = vmatprep.subr.bf16.mxu0 %v1361
    %1528 = vmatpush1.bf16.msra.mxu0 %v1360
    %1529 = vmatprep.subr.bf16.mxu0 %v1402
    %1530 = vmatpush1.bf16.msra.mxu0 %v1399
    %1531 = vmatprep.subr.bf16.mxu0 0
    %1532 = vmatpush1.bf16.msra.mxu0 0
    %1533 = vmatprep.subr.bf16.mxu0 0
    %1534 = vmatpush1.bf16.msra.mxu0 0
    %1535 = vmatprep.subr.bf16.mxu0 0
    %1536 = vmatpush1.bf16.msra.mxu0 0
    %1537 = vmatprep.subr.bf16.mxu0 0
    %1538 = vmatpush1.bf16.msra.mxu0 0
    %1539 = vmatprep.subr.bf16.mxu0 0
    %1540 = vmatpush1.bf16.msra.mxu0 0
    %1541 = vmatprep.subr.bf16.mxu0 0
    %1542 = vmatpush1.bf16.msra.mxu0 0
    %1543 = vmatprep.subr.bf16.mxu0 0
    %1544 = vmatpush1.bf16.msra.mxu0 0
    %1545 = vmatprep.subr.bf16.mxu0 0
    %1546 = vmatpush1.bf16.msra.mxu0 0
    %1547 = vmatprep.subr.bf16.mxu0 0
    %1548 = vmatpush1.bf16.msra.mxu0 0
    %1549 = vmatprep.subr.bf16.mxu0 0
    %1550 = vmatpush1.bf16.msra.mxu0 0
    %1551 = vmatprep.subr.bf16.mxu0 0
    %1552 = vmatpush1.bf16.msra.mxu0 0
    %1553 = vmatprep.subr.bf16.mxu0 0
    %1554 = vmatpush1.bf16.msra.mxu0 0
    %1555 = vmatprep.subr.bf16.mxu0 0
    %1556 = vmatpush1.bf16.msra.mxu0 0
    %1557 = vmatprep.subr.bf16.mxu0 0
    %1558 = vmatpush1.bf16.msra.mxu0 0
    %1559 = vmatprep.mubr.bf16.mxu0 0
    %1560 = vmatmul.mubr.bf16.gmra.mrb[0].mxu0 %v1378
    %v1561 = vpop.f32.mrb[0].mxu0
    %v1562 = vadd.f32 %v1375, %v1561
    %v1563 = vpop.f32.mrb[0].mxu0
    %v1564 = vadd.f32 %v1375, %v1563
    %v1565 = vpop.f32.mrb[0].mxu0
    %v1566 = vpop.f32.mrb[0].mxu0
    %1567 = vdwg.mxu0
    %v1568 = vadd.f32 %v1439, %v311
    %v1569 = vadd.f32 %v1441, %v312
    %v1570 = vadd.f32 %v1480, %v313
    %v1571 = vadd.f32 %v1482, %v314
    %v1572 = vadd.f32 %v1521, %v315
    %v1573 = vadd.f32 %v1523, %v316
    %v1574 = vadd.f32 %v1562, %v317
    %v1575 = vadd.f32 %v1564, %v318
    %v1576 = vmax.f32 %v1568, 0.0
    %v1577 = vmax.f32 %v1569, 0.0
    %v1578 = vmax.f32 %v1570, 0.0
    %v1579 = vmax.f32 %v1571, 0.0
    %v1580 = vmax.f32 %v1572, 0.0
    %v1581 = vmax.f32 %v1573, 0.0
    %v1582 = vmax.f32 %v1574, 0.0
    %v1583 = vmax.f32 %v1575, 0.0
    %1584 = vst [vmem:[#allocation5] sm:$0xff] %v1576
    %1585 = vst [vmem:[#allocation5 + $0x8] sm:$0xff] %v1577
    %1586 = vst [vmem:[#allocation5 + $0x10] sm:$0xff] %v1578
    %1587 = vst [vmem:[#allocation5 + $0x18] sm:$0xff] %v1579
    %1588 = vst [vmem:[#allocation5 + $0x20] sm:$0xff] %v1580
    %1589 = vst [vmem:[#allocation5 + $0x28] sm:$0xff] %v1581
    %1590 = vst [vmem:[#allocation5 + $0x30] sm:$0xff] %v1582
    %1591 = vst [vmem:[#allocation5 + $0x38] sm:$0xff] %v1583
    // Predicated region
    $region42: #{tpu_custom_call.1} parent=1 // pred_check
      _
    $region43: #{tpu_custom_call.1} parent=1 // pred_check_branch
      %1593 = sbr.rel (0) target = $region45
    $region44: #{tpu_custom_call.1} parent=1 // pred_region
      %s1595 = ssub.s32 1024, 1024
      %1596 = vsyncadd [#allocation4], %s1595
      %s1598 = sshll.u32 [#allocation5], 4
      %s1599 = int_to_ptr.vmem [resolvable:$true] %s1598
      %1601 = dma.vmem_to_hbm [thread:$0]  %s1599, 1024, %s9, [#allocation4]
    $region45: #{tpu_custom_call.1} parent=1 // pred_fallthru
      _
    // Predicated region
    $region46: #{tpu_custom_call.1} parent=1 // pred_check
      _
    $region47: #{tpu_custom_call.1} parent=1 // pred_check_branch
      %1603 = sbr.rel (0) target = $region49
    $region48: #{tpu_custom_call.1} parent=1 // pred_region
      %1604 = dma.done [#allocation4], 1024
    $region49: #{tpu_custom_call.1} parent=1 // pred_fallthru
      _
    %1605 = vsyncpa [#allocation3], 1
    %1606 = vsyncpa [#allocation4], 1

</llo_original>
